<compile_context>
chip_gen: v5e
topology: v5e:2x2
jax: 0.10.0
libtpu: 0.0.40
codegen_flags: <defaults>
</compile_context>

<pallas_src>
import jax
import jax.numpy as jnp
from jax.experimental import pallas as pl
from jax.experimental.pallas import tpu as pltpu


def _cross_vector_kernel(xg_ref, rt_ref, wq_ref, wl_ref, c_ref, o_ref):
    """One batch tile; G logical rows packed per kernel row.

    xg_ref : (TBg, G*F)        packed inputs (kernel row b holds logical rows G*b .. G*b+G-1)
    rt_ref : (G*F, 2*G*F*F)    merged one-hot selectors [Rbig | Tbig]
    wq_ref : (G*F*F, G*OUT)    block-diagonal quadratic weight
    wl_ref : (G*F, G*OUT)      block-diagonal linear weight
    c_ref  : (1, G*OUT)        constant term (W[:,0] + bias), tiled G times
    o_ref  : (TBg, G*OUT)      packed, lane-dense output
    """
    xg = xg_ref[...]                                                          # (TBg, G*F)

    # One merged selector matmul; left/right are vreg-aligned static lane slices:
    #   left [b, s*F*F + p*F + q] = xg[b, s*F + p]
    #   right[b, s*F*F + p*F + q] = xg[b, s*F + q]
    lr = jnp.dot(xg, rt_ref[...], preferred_element_type=jnp.float32)         # (TBg, 2*G*F*F)
    half = lr.shape[-1] // 2
    outer = lr[:, :half] * lr[:, half:]                                       # vec(x x^T), (TBg, G*F*F)

    # Decomposed projection: quadratic + linear + constant.
    y = jnp.dot(outer, wq_ref[...], preferred_element_type=jnp.float32)       # (TBg, G*OUT)
    y = y + jnp.dot(xg, wl_ref[...], preferred_element_type=jnp.float32)
    y = y + c_ref[...]                                                        # sublane broadcast
    o_ref[...] = y.astype(o_ref.dtype)


def _choose_tile(rows_g, tbg_max):
    """Grouped-row tile + grid length: minimal padding, >=2 steps when possible (v7x)."""
    if rows_g <= 8:
        return rows_g, 1                       # single block == full array (legal sublane count)
    tbg_max = max(8, (tbg_max // 8) * 8)
    n_steps = max(2, -(-rows_g // tbg_max))    # >=2 steps: shard across both v7x TensorCores
    tbg = ((-(-rows_g // n_steps) + 7) // 8) * 8
    n_steps = -(-rows_g // tbg)
    return tbg, n_steps


def cross_vector_forward(x, weight, bias, *, feather_size, out_feather_size=None,
                         rows_per_step=1024):
    """Pallas forward for CrossVector. x: (..., feather_size) -> (..., out_feather_size)."""
    F = feather_size
    OUT = F if out_feather_size is None else out_feather_size
    F1 = F + 1
    INNER = F1 * F1
    assert x.shape[-1] == F, "CrossVector expects last dim == in_feather_size"
    assert weight.shape == (OUT, INNER) and bias.shape == (OUT,)

    src_shape = x.shape
    final_shape = src_shape[:-1] + (OUT,)
    xf = x.reshape(-1, F).astype(jnp.float32)
    rows = xf.shape[0]
    if rows == 0:                              # review: guard grid=(0,) edge case
        return jnp.zeros(final_shape, x.dtype)

    # --- packing factor: G logical rows per kernel row (lane-dense in & out) ---
    G = 128 // OUT if (0 < OUT <= 128 and 128 % OUT == 0) else 1
    GF, GFF, GOUT = G * F, G * F * F, G * OUT

    rows_g = -(-rows // G)
    tbg, n_steps = _choose_tile(rows_g, max(1, rows_per_step // G))
    BPg = tbg * n_steps
    pad = BPg * G - rows
    if pad:
        xf = jnp.pad(xf, ((0, pad), (0, 0)))   # single prep op; padded rows are all-zero
    xg = xf.reshape(BPg, GF)                   # free row-major packing

    # --- decomposed weights (glue, built once in plain JAX) ---
    f32 = jnp.float32
    Wt = weight.astype(f32).T.reshape(F1, F1, OUT)     # Wt[a, b, o] = W[o, a*F1 + b]
    wq = Wt[1:, 1:, :].reshape(F * F, OUT)             # quadratic part      (F*F, OUT)
    wl = Wt[0, 1:, :] + Wt[1:, 0, :]                   # both linear cross terms (F, OUT)
    c = Wt[0, 0, :] + bias.astype(f32)                 # constant            (OUT,)

    eye_g = jnp.eye(G, dtype=f32)
    wq_blk = jnp.kron(eye_g, wq)                       # (GFF, GOUT) block-diagonal
    wl_blk = jnp.kron(eye_g, wl)                       # (GF,  GOUT) block-diagonal
    c_blk = jnp.tile(c, G).reshape(1, GOUT)            # (1,   GOUT)

    # Merged one-hot selectors (exact copies of x entries; MXU-friendly shapes).
    p_idx = jnp.arange(F * F) // F
    q_idx = jnp.arange(F * F) % F
    row_idx = jnp.arange(F)[:, None]
    r_small = (row_idx == p_idx[None, :]).astype(f32)  # (F, F*F): picks x_p
    t_small = (row_idx == q_idx[None, :]).astype(f32)  # (F, F*F): picks x_q
    rt_blk = jnp.concatenate([jnp.kron(eye_g, r_small),
                              jnp.kron(eye_g, t_small)], axis=1)   # (GF, 2*GFF)

    out = pl.pallas_call(
        _cross_vector_kernel,
        out_shape=jax.ShapeDtypeStruct((BPg, GOUT), jnp.float32),
        grid=(n_steps,),
        in_specs=[
            pl.BlockSpec((tbg, GF), lambda i: (i, 0)),
            pl.BlockSpec((GF, 2 * GFF), lambda i: (0, 0)),
            pl.BlockSpec((GFF, GOUT), lambda i: (0, 0)),
            pl.BlockSpec((GF, GOUT), lambda i: (0, 0)),
            pl.BlockSpec((1, GOUT), lambda i: (0, 0)),
        ],
        # v5e: if output writeback is still exposed in a profile, switch to
        #   pl.BlockSpec((tbg, GOUT), lambda i: (i, 0), pipeline_mode=pl.Buffered(3))
        out_specs=pl.BlockSpec((tbg, GOUT), lambda i: (i, 0)),
        compiler_params=pltpu.CompilerParams(dimension_semantics=("parallel",)),
    )(xg, rt_blk, wq_blk, wl_blk, c_blk)

    # Free row-major unpacking, then crop padded rows (they only hold `c`).
    y = out.reshape(BPg * G, OUT)[:rows]
    return y.reshape(final_shape).astype(x.dtype)


def cross_vector_reference(x, weight, bias, feather_size, out_feather_size=None):
    F = feather_size
    OUT = F if out_feather_size is None else out_feather_size
    src_shape = x.shape
    xf = x.reshape(-1, F).astype(jnp.float32)
    rows = xf.shape[0]
    x1 = jnp.concatenate([jnp.ones((rows, 1), jnp.float32), xf], axis=-1)     # (rows, F+1)
    outer = x1[:, :, None] * x1[:, None, :]                                   # (rows, F+1, F+1)
    flat = outer.reshape(rows, -1)                                            # (rows, (F+1)^2)
    y = flat @ weight.T.astype(jnp.float32) + bias.astype(jnp.float32)
    return y.reshape(src_shape[:-1] + (OUT,))


if __name__ == "__main__":
    key = jax.random.PRNGKey(0)
    k_x, k_w, k_b = jax.random.split(key, 3)

    batch, seq = 2, 8
    feather = 16               # CrossVector(in_feather_size=16)
    out_feather = 16           # default: out_feather_size = in_feather_size
    inner = (feather + 1) ** 2

    # Deterministic synthetic parameters (nn.Linear(inner, OUT) default-style init).
    bound = 1.0 / (inner ** 0.5)
    weight = jax.random.uniform(k_w, (out_feather, inner), jnp.float32, -bound, bound)
    bias = jax.random.uniform(k_b, (out_feather,), jnp.float32, -bound, bound)

    x = jax.random.normal(k_x, (batch, seq, feather), jnp.float32)

    out = cross_vector_forward(x, weight, bias, feather_size=feather,
                               out_feather_size=out_feather)
    out = jax.block_until_ready(out)

    ref = cross_vector_reference(x, weight, bias, feather, out_feather)
    assert out.shape == (batch, seq, out_feather)
    assert jnp.allclose(out, ref, atol=1e-4, rtol=1e-4), "mismatch vs reference"

    print("KERNEL_OK")
</pallas_src>

<mosaic_0001>
module attributes {stable_mosaic.version = 11 : i64} {
  func.func @_cross_vector_kernel(%arg0: i32, %arg1: memref<2x128xf32, #tpu.memory_space<vmem>>, %arg2: memref<128x4096xf32, #tpu.memory_space<vmem>>, %arg3: memref<2048x128xf32, #tpu.memory_space<vmem>>, %arg4: memref<128x128xf32, #tpu.memory_space<vmem>>, %arg5: memref<1x128xf32, #tpu.memory_space<vmem>>, %arg6: memref<2x128xf32, #tpu.memory_space<vmem>>) attributes {dimension_semantics = [#tpu.dimension_semantics<parallel>], iteration_bounds = array<i64: 1>, scalar_prefetch = 0 : i64, scratch_operands = 0 : i64, tpu.core_type = #tpu.core_type<tc>, window_params = [{transform_indices = @transform_0, window_bounds = array<i64: 2, 128>}, {pipeline_mode = #tpu.pipeline_mode<synchronous>, transform_indices = @transform_1, window_bounds = array<i64: 128, 4096>}, {pipeline_mode = #tpu.pipeline_mode<synchronous>, transform_indices = @transform_2, window_bounds = array<i64: 2048, 128>}, {pipeline_mode = #tpu.pipeline_mode<synchronous>, transform_indices = @transform_3, window_bounds = array<i64: 128, 128>}, {pipeline_mode = #tpu.pipeline_mode<synchronous>, transform_indices = @transform_4, window_bounds = array<i64: 1, 128>}, {transform_indices = @transform_5, window_bounds = array<i64: 2, 128>}]} {
    %c0 = arith.constant 0 : index
    %c0_0 = arith.constant 0 : index
    %0 = vector.load %arg1[%c0, %c0_0] : memref<2x128xf32, #tpu.memory_space<vmem>>, vector<2x128xf32>
    %c0_1 = arith.constant 0 : index
    %c0_2 = arith.constant 0 : index
    %1 = vector.load %arg2[%c0_1, %c0_2] : memref<128x4096xf32, #tpu.memory_space<vmem>>, vector<128x4096xf32>
    %cst = arith.constant dense<0.000000e+00> : vector<2x4096xf32>
    %2 = tpu.matmul %0, %1, %cst {dimension_numbers = #tpu.dot_dimension_numbers<[1], [0], [0], [1], [0, 0, 1, 1], [], []>} : vector<2x128xf32>, vector<128x4096xf32>, vector<2x4096xf32> -> vector<2x4096xf32>
    %3 = vector.extract_strided_slice %2 {offsets = [0, 0], sizes = [2, 2048], strides = [1, 1]} : vector<2x4096xf32> to vector<2x2048xf32>
    %4 = vector.extract_strided_slice %2 {offsets = [0, 2048], sizes = [2, 2048], strides = [1, 1]} : vector<2x4096xf32> to vector<2x2048xf32>
    %5 = arith.mulf %3, %4 : vector<2x2048xf32>
    %c0_3 = arith.constant 0 : index
    %c0_4 = arith.constant 0 : index
    %6 = vector.load %arg3[%c0_3, %c0_4] : memref<2048x128xf32, #tpu.memory_space<vmem>>, vector<2048x128xf32>
    %cst_5 = arith.constant dense<0.000000e+00> : vector<2x128xf32>
    %7 = tpu.matmul %5, %6, %cst_5 {dimension_numbers = #tpu.dot_dimension_numbers<[1], [0], [0], [1], [0, 0, 1, 1], [], []>} : vector<2x2048xf32>, vector<2048x128xf32>, vector<2x128xf32> -> vector<2x128xf32>
    %c0_6 = arith.constant 0 : index
    %c0_7 = arith.constant 0 : index
    %8 = vector.load %arg4[%c0_6, %c0_7] : memref<128x128xf32, #tpu.memory_space<vmem>>, vector<128x128xf32>
    %cst_8 = arith.constant dense<0.000000e+00> : vector<2x128xf32>
    %9 = tpu.matmul %0, %8, %cst_8 {dimension_numbers = #tpu.dot_dimension_numbers<[1], [0], [0], [1], [0, 0, 1, 1], [], []>} : vector<2x128xf32>, vector<128x128xf32>, vector<2x128xf32> -> vector<2x128xf32>
    %10 = arith.addf %7, %9 : vector<2x128xf32>
    %c0_9 = arith.constant 0 : index
    %c0_10 = arith.constant 0 : index
    %11 = vector.load %arg5[%c0_9, %c0_10] : memref<1x128xf32, #tpu.memory_space<vmem>>, vector<1x128xf32>
    %12 = vector.broadcast %11 : vector<1x128xf32> to vector<2x128xf32>
    %13 = arith.addf %10, %12 : vector<2x128xf32>
    %c0_11 = arith.constant 0 : index
    %c0_12 = arith.constant 0 : index
    %14 = vector.load %arg6[%c0_11, %c0_12] : memref<2x128xf32, #tpu.memory_space<vmem>>, vector<2x128xf32>
    tpu.vector_store %arg6[%c0_11, %c0_12], %13 {strides = array<i32>} : memref<2x128xf32, #tpu.memory_space<vmem>>, vector<2x128xf32>,
    return
  }
  func.func @transform_0(%arg0: i32) -> (i32, i32) {
    %c0_i32 = arith.constant 0 : i32
    %c0_i32_0 = arith.constant 0 : i32
    return %arg0, %c0_i32 : i32, i32
  }
  func.func @transform_1(%arg0: i32) -> (i32, i32) {
    %c0_i32 = arith.constant 0 : i32
    %c0_i32_0 = arith.constant 0 : i32
    %c0_i32_1 = arith.constant 0 : i32
    return %c0_i32, %c0_i32_0 : i32, i32
  }
  func.func @transform_2(%arg0: i32) -> (i32, i32) {
    %c0_i32 = arith.constant 0 : i32
    %c0_i32_0 = arith.constant 0 : i32
    %c0_i32_1 = arith.constant 0 : i32
    return %c0_i32, %c0_i32_0 : i32, i32
  }
  func.func @transform_3(%arg0: i32) -> (i32, i32) {
    %c0_i32 = arith.constant 0 : i32
    %c0_i32_0 = arith.constant 0 : i32
    %c0_i32_1 = arith.constant 0 : i32
    return %c0_i32, %c0_i32_0 : i32, i32
  }
  func.func @transform_4(%arg0: i32) -> (i32, i32) {
    %c0_i32 = arith.constant 0 : i32
    %c0_i32_0 = arith.constant 0 : i32
    %c0_i32_1 = arith.constant 0 : i32
    return %c0_i32, %c0_i32_0 : i32, i32
  }
  func.func @transform_5(%arg0: i32) -> (i32, i32) {
    %c0_i32 = arith.constant 0 : i32
    %c0_i32_0 = arith.constant 0 : i32
    return %arg0, %c0_i32 : i32, i32
  }
}

</mosaic_0001>

<llo_original>
// kernel: tpu_custom_call.1
$region0: #{tpu_custom_call.1}
  #allocation0 [shape = 'u32[]', space=smem, size = 0x4, offset = 0x4, fixed_abs, tag = 'smem constant byte address 0x4 - core index']
  #allocation1 [shape = 'u32[72,128]{1,0:T(1,128)}', space=vmem, size = 0x9000, scoped, tag = 'internal scratch']
  %s0 = inlined_call_operand.hbm [shape: f32[2,128], index: 0, kind: input, shape index: {}]
  %s1 = inlined_call_operand.hbm [shape: f32[128,4096], index: 1, kind: input, shape index: {}]
  %s2 = inlined_call_operand.hbm [shape: f32[2048,128], index: 2, kind: input, shape index: {}]
  %s3 = inlined_call_operand.hbm [shape: f32[128,128], index: 3, kind: input, shape index: {}]
  %s4 = inlined_call_operand.hbm [shape: f32[1,128], index: 4, kind: input, shape index: {}]
  %s5 = inlined_call_operand.hbm [shape: f32[2,128], index: 5, kind: output, shape index: {}]
  %s6 = sld [smem:[#allocation0]]
  $region50: #{tpu_custom_call.1} parent=0
    _
  %s8 = ssub.s32 1, %s6
  %s9 = scalar_select 0, %s8, %s6
  $region1: #{tpu_custom_call.1} parent=0
    #allocation2 [shape = 'u8[1024]{0}', space=vmem, size = 0x400, scoped, tag = 'input window, operand 0, single buffered']
    #allocation3 [shape = 's32[1]{0}', space=sflag, size = 0x4, scoped, tag = 'scoped memory for tpu_custom_call.1']
    #allocation4 [shape = 's32[1]{0}', space=sflag, size = 0x4, scoped, tag = 'scoped memory for tpu_custom_call.1']
    #allocation5 [shape = 'u8[2097152]{0}', space=vmem, size = 0x200000, scoped, tag = 'input window, operand 1, single buffered']
    #allocation6 [shape = 's32[1]{0}', space=sflag, size = 0x4, scoped, tag = 'scoped memory for tpu_custom_call.1']
    #allocation7 [shape = 'u8[1048576]{0}', space=vmem, size = 0x100000, scoped, tag = 'input window, operand 2, single buffered']
    #allocation8 [shape = 'u8[65536]{0}', space=vmem, size = 0x10000, scoped, tag = 'input window, operand 3, single buffered']
    #allocation9 [shape = 's32[1]{0}', space=sflag, size = 0x4, scoped, tag = 'scoped memory for tpu_custom_call.1']
    #allocation10 [shape = 'u8[512]{0}', space=vmem, size = 0x400, scoped, tag = 'input window, operand 4, single buffered']
    #allocation11 [shape = 'u8[1024]{0}', space=vmem, size = 0x400, scoped, tag = 'output window, operand 0, single buffered']
    %10 = vsyncpa [#allocation3], 0
    %11 = vsyncpa [#allocation6], 0
    %12 = vsyncpa [#allocation9], 0
    %13 = vsyncpa [#allocation4], 0
    // Predicated region
    $region2: #{tpu_custom_call.1} parent=1 // pred_check
      _
    $region3: #{tpu_custom_call.1} parent=1 // pred_check_branch
      %15 = sbr.rel (0) target = $region5
    $region4: #{tpu_custom_call.1} parent=1 // pred_region
      %17 = vsyncadd [#allocation3], 0
      %s19 = sshll.u32 %s0, 4
      %s20 = int_to_ptr.hbm [resolvable:$true] %s19
      %s21 = sshll.u32 [#allocation2], 4
      %s22 = int_to_ptr.vmem [resolvable:$true] %s21
      %24 = dma.hbm_to_vmem [thread:$0]  %s20, 32, %s22, [#allocation3]
    $region5: #{tpu_custom_call.1} parent=1 // pred_fallthru
      _
    // Predicated region
    $region6: #{tpu_custom_call.1} parent=1 // pred_check
      _
    $region7: #{tpu_custom_call.1} parent=1 // pred_check_branch
      %26 = sbr.rel (0) target = $region9
    $region8: #{tpu_custom_call.1} parent=1 // pred_region
      %28 = vsyncadd [#allocation6], 0
      %s29 = sshll.u32 %s1, 4
      %s30 = int_to_ptr.hbm [resolvable:$true] %s29
      %s31 = sshll.u32 [#allocation5], 4
      %s32 = int_to_ptr.vmem [resolvable:$true] %s31
      %37 = dma.hbm_to_vmem [thread:$0]  %s30, 65536, %s32, [#allocation6], 4096, 4096, 256
    $region9: #{tpu_custom_call.1} parent=1 // pred_fallthru
      _
    // Predicated region
    $region10: #{tpu_custom_call.1} parent=1 // pred_check
      _
    $region11: #{tpu_custom_call.1} parent=1 // pred_check_branch
      %39 = sbr.rel (0) target = $region13
    $region12: #{tpu_custom_call.1} parent=1 // pred_region
      %41 = vsyncadd [#allocation6], 0
      %s42 = sshll.u32 %s2, 4
      %s43 = int_to_ptr.hbm [resolvable:$true] %s42
      %s44 = sshll.u32 [#allocation7], 4
      %s45 = int_to_ptr.vmem [resolvable:$true] %s44
      %50 = dma.hbm_to_vmem [thread:$0]  %s43, 32768, %s45, [#allocation6], 128, 128, 8
    $region13: #{tpu_custom_call.1} parent=1 // pred_fallthru
      _
    // Predicated region
    $region14: #{tpu_custom_call.1} parent=1 // pred_check
      _
    $region15: #{tpu_custom_call.1} parent=1 // pred_check_branch
      %52 = sbr.rel (0) target = $region17
    $region16: #{tpu_custom_call.1} parent=1 // pred_region
      %54 = vsyncadd [#allocation9], 0
      %s55 = sshll.u32 %s3, 4
      %s56 = int_to_ptr.hbm [resolvable:$true] %s55
      %s57 = sshll.u32 [#allocation8], 4
      %s58 = int_to_ptr.vmem [resolvable:$true] %s57
      %63 = dma.hbm_to_vmem [thread:$0]  %s56, 2048, %s58, [#allocation9], 128, 128, 8
    $region17: #{tpu_custom_call.1} parent=1 // pred_fallthru
      _
    // Predicated region
    $region18: #{tpu_custom_call.1} parent=1 // pred_check
      _
    $region19: #{tpu_custom_call.1} parent=1 // pred_check_branch
      %65 = sbr.rel (0) target = $region21
    $region20: #{tpu_custom_call.1} parent=1 // pred_region
      %67 = vsyncadd [#allocation9], 0
      %s69 = sshll.u32 %s4, 4
      %s70 = int_to_ptr.hbm [resolvable:$true] %s69
      %s71 = sshll.u32 [#allocation10], 4
      %s72 = int_to_ptr.vmem [resolvable:$true] %s71
      %74 = dma.hbm_to_vmem [thread:$0]  %s70, 16, %s72, [#allocation9]
    $region21: #{tpu_custom_call.1} parent=1 // pred_fallthru
      _
    // Predicated region
    $region22: #{tpu_custom_call.1} parent=1 // pred_check
      _
    $region23: #{tpu_custom_call.1} parent=1 // pred_check_branch
      %76 = sbr.rel (0) target = $region25
    $region24: #{tpu_custom_call.1} parent=1 // pred_region
      %78 = dma.done [#allocation3], 32
    $region25: #{tpu_custom_call.1} parent=1 // pred_fallthru
      _
    // Predicated region
    $region26: #{tpu_custom_call.1} parent=1 // pred_check
      _
    $region27: #{tpu_custom_call.1} parent=1 // pred_check_branch
      %80 = sbr.rel (0) target = $region29
    $region28: #{tpu_custom_call.1} parent=1 // pred_region
      %82 = dma.done [#allocation6], 65536
    $region29: #{tpu_custom_call.1} parent=1 // pred_fallthru
      _
    // Predicated region
    $region30: #{tpu_custom_call.1} parent=1 // pred_check
      _
    $region31: #{tpu_custom_call.1} parent=1 // pred_check_branch
      %84 = sbr.rel (0) target = $region33
    $region32: #{tpu_custom_call.1} parent=1 // pred_region
      %86 = dma.done [#allocation6], 32768
    $region33: #{tpu_custom_call.1} parent=1 // pred_fallthru
      _
    // Predicated region
    $region34: #{tpu_custom_call.1} parent=1 // pred_check
      _
    $region35: #{tpu_custom_call.1} parent=1 // pred_check_branch
      %88 = sbr.rel (0) target = $region37
    $region36: #{tpu_custom_call.1} parent=1 // pred_region
      %90 = dma.done [#allocation9], 2048
    $region37: #{tpu_custom_call.1} parent=1 // pred_fallthru
      _
    // Predicated region
    $region38: #{tpu_custom_call.1} parent=1 // pred_check
      _
    $region39: #{tpu_custom_call.1} parent=1 // pred_check_branch
      %92 = sbr.rel (0) target = $region41
    $region40: #{tpu_custom_call.1} parent=1 // pred_region
      %94 = dma.done [#allocation9], 16
    $region41: #{tpu_custom_call.1} parent=1 // pred_fallthru
      _
    %v95 = vld [vmem:[#allocation2] sm:$0x3]
    %v96 = vld [vmem:[#allocation5] sm:$0xff]
    %v97 = vld [vmem:[#allocation5 + $0x8] sm:$0xff]
    %v98 = vld [vmem:[#allocation5 + $0x10] sm:$0xff]
    %v99 = vld [vmem:[#allocation5 + $0x18] sm:$0xff]
    %v100 = vld [vmem:[#allocation5 + $0x20] sm:$0xff]
    %v101 = vld [vmem:[#allocation5 + $0x28] sm:$0xff]
    %v102 = vld [vmem:[#allocation5 + $0x30] sm:$0xff]
    %v103 = vld [vmem:[#allocation5 + $0x38] sm:$0xff]
    %v104 = vld [vmem:[#allocation5 + $0x40] sm:$0xff]
    %v105 = vld [vmem:[#allocation5 + $0x48] sm:$0xff]
    %v106 = vld [vmem:[#allocation5 + $0x50] sm:$0xff]
    %v107 = vld [vmem:[#allocation5 + $0x58] sm:$0xff]
    %v108 = vld [vmem:[#allocation5 + $0x60] sm:$0xff]
    %v109 = vld [vmem:[#allocation5 + $0x68] sm:$0xff]
    %v110 = vld [vmem:[#allocation5 + $0x70] sm:$0xff]
    %v111 = vld [vmem:[#allocation5 + $0x78] sm:$0xff]
    %v112 = vld [vmem:[#allocation5 + $0x80] sm:$0xff]
    %v113 = vld [vmem:[#allocation5 + $0x88] sm:$0xff]
    %v114 = vld [vmem:[#allocation5 + $0x90] sm:$0xff]
    %v115 = vld [vmem:[#allocation5 + $0x98] sm:$0xff]
    %v116 = vld [vmem:[#allocation5 + $0xa0] sm:$0xff]
    %v117 = vld [vmem:[#allocation5 + $0xa8] sm:$0xff]
    %v118 = vld [vmem:[#allocation5 + $0xb0] sm:$0xff]
    %v119 = vld [vmem:[#allocation5 + $0xb8] sm:$0xff]
    %v120 = vld [vmem:[#allocation5 + $0xc0] sm:$0xff]
    %v121 = vld [vmem:[#allocation5 + $0xc8] sm:$0xff]
    %v122 = vld [vmem:[#allocation5 + $0xd0] sm:$0xff]
    %v123 = vld [vmem:[#allocation5 + $0xd8] sm:$0xff]
    %v124 = vld [vmem:[#allocation5 + $0xe0] sm:$0xff]
    %v125 = vld [vmem:[#allocation5 + $0xe8] sm:$0xff]
    %v126 = vld [vmem:[#allocation5 + $0xf0] sm:$0xff]
    %v127 = vld [vmem:[#allocation5 + $0xf8] sm:$0xff]
    %v128 = vld [vmem:[#allocation5 + $0x100] sm:$0xff]
    %v129 = vld [vmem:[#allocation5 + $0x108] sm:$0xff]
    %v130 = vld [vmem:[#allocation5 + $0x110] sm:$0xff]
    %v131 = vld [vmem:[#allocation5 + $0x118] sm:$0xff]
    %v132 = vld [vmem:[#allocation5 + $0x120] sm:$0xff]
    %v133 = vld [vmem:[#allocation5 + $0x128] sm:$0xff]
    %v134 = vld [vmem:[#allocation5 + $0x130] sm:$0xff]
    %v135 = vld [vmem:[#allocation5 + $0x138] sm:$0xff]
    %v136 = vld [vmem:[#allocation5 + $0x140] sm:$0xff]
    %v137 = vld [vmem:[#allocation5 + $0x148] sm:$0xff]
    %v138 = vld [vmem:[#allocation5 + $0x150] sm:$0xff]
    %v139 = vld [vmem:[#allocation5 + $0x158] sm:$0xff]
    %v140 = vld [vmem:[#allocation5 + $0x160] sm:$0xff]
    %v141 = vld [vmem:[#allocation5 + $0x168] sm:$0xff]
    %v142 = vld [vmem:[#allocation5 + $0x170] sm:$0xff]
    %v143 = vld [vmem:[#allocation5 + $0x178] sm:$0xff]
    %v144 = vld [vmem:[#allocation5 + $0x180] sm:$0xff]
    %v145 = vld [vmem:[#allocation5 + $0x188] sm:$0xff]
    %v146 = vld [vmem:[#allocation5 + $0x190] sm:$0xff]
    %v147 = vld [vmem:[#allocation5 + $0x198] sm:$0xff]
    %v148 = vld [vmem:[#allocation5 + $0x1a0] sm:$0xff]
    %v149 = vld [vmem:[#allocation5 + $0x1a8] sm:$0xff]
    %v150 = vld [vmem:[#allocation5 + $0x1b0] sm:$0xff]
    %v151 = vld [vmem:[#allocation5 + $0x1b8] sm:$0xff]
    %v152 = vld [vmem:[#allocation5 + $0x1c0] sm:$0xff]
    %v153 = vld [vmem:[#allocation5 + $0x1c8] sm:$0xff]
    %v154 = vld [vmem:[#allocation5 + $0x1d0] sm:$0xff]
    %v155 = vld [vmem:[#allocation5 + $0x1d8] sm:$0xff]
    %v156 = vld [vmem:[#allocation5 + $0x1e0] sm:$0xff]
    %v157 = vld [vmem:[#allocation5 + $0x1e8] sm:$0xff]
    %v158 = vld [vmem:[#allocation5 + $0x1f0] sm:$0xff]
    %v159 = vld [vmem:[#allocation5 + $0x1f8] sm:$0xff]
    %v160 = vld [vmem:[#allocation5 + $0x200] sm:$0xff]
    %v161 = vld [vmem:[#allocation5 + $0x208] sm:$0xff]
    %v162 = vld [vmem:[#allocation5 + $0x210] sm:$0xff]
    %v163 = vld [vmem:[#allocation5 + $0x218] sm:$0xff]
    %v164 = vld [vmem:[#allocation5 + $0x220] sm:$0xff]
    %v165 = vld [vmem:[#allocation5 + $0x228] sm:$0xff]
    %v166 = vld [vmem:[#allocation5 + $0x230] sm:$0xff]
    %v167 = vld [vmem:[#allocation5 + $0x238] sm:$0xff]
    %v168 = vld [vmem:[#allocation5 + $0x240] sm:$0xff]
    %v169 = vld [vmem:[#allocation5 + $0x248] sm:$0xff]
    %v170 = vld [vmem:[#allocation5 + $0x250] sm:$0xff]
    %v171 = vld [vmem:[#allocation5 + $0x258] sm:$0xff]
    %v172 = vld [vmem:[#allocation5 + $0x260] sm:$0xff]
    %v173 = vld [vmem:[#allocation5 + $0x268] sm:$0xff]
    %v174 = vld [vmem:[#allocation5 + $0x270] sm:$0xff]
    %v175 = vld [vmem:[#allocation5 + $0x278] sm:$0xff]
    %v176 = vld [vmem:[#allocation5 + $0x280] sm:$0xff]
    %v177 = vld [vmem:[#allocation5 + $0x288] sm:$0xff]
    %v178 = vld [vmem:[#allocation5 + $0x290] sm:$0xff]
    %v179 = vld [vmem:[#allocation5 + $0x298] sm:$0xff]
    %v180 = vld [vmem:[#allocation5 + $0x2a0] sm:$0xff]
    %v181 = vld [vmem:[#allocation5 + $0x2a8] sm:$0xff]
    %v182 = vld [vmem:[#allocation5 + $0x2b0] sm:$0xff]
    %v183 = vld [vmem:[#allocation5 + $0x2b8] sm:$0xff]
    %v184 = vld [vmem:[#allocation5 + $0x2c0] sm:$0xff]
    %v185 = vld [vmem:[#allocation5 + $0x2c8] sm:$0xff]
    %v186 = vld [vmem:[#allocation5 + $0x2d0] sm:$0xff]
    %v187 = vld [vmem:[#allocation5 + $0x2d8] sm:$0xff]
    %v188 = vld [vmem:[#allocation5 + $0x2e0] sm:$0xff]
    %v189 = vld [vmem:[#allocation5 + $0x2e8] sm:$0xff]
    %v190 = vld [vmem:[#allocation5 + $0x2f0] sm:$0xff]
    %v191 = vld [vmem:[#allocation5 + $0x2f8] sm:$0xff]
    %v192 = vld [vmem:[#allocation5 + $0x300] sm:$0xff]
    %v193 = vld [vmem:[#allocation5 + $0x308] sm:$0xff]
    %v194 = vld [vmem:[#allocation5 + $0x310] sm:$0xff]
    %v195 = vld [vmem:[#allocation5 + $0x318] sm:$0xff]
    %v196 = vld [vmem:[#allocation5 + $0x320] sm:$0xff]
    %v197 = vld [vmem:[#allocation5 + $0x328] sm:$0xff]
    %v198 = vld [vmem:[#allocation5 + $0x330] sm:$0xff]
    %v199 = vld [vmem:[#allocation5 + $0x338] sm:$0xff]
    %v200 = vld [vmem:[#allocation5 + $0x340] sm:$0xff]
    %v201 = vld [vmem:[#allocation5 + $0x348] sm:$0xff]
    %v202 = vld [vmem:[#allocation5 + $0x350] sm:$0xff]
    %v203 = vld [vmem:[#allocation5 + $0x358] sm:$0xff]
    %v204 = vld [vmem:[#allocation5 + $0x360] sm:$0xff]
    %v205 = vld [vmem:[#allocation5 + $0x368] sm:$0xff]
    %v206 = vld [vmem:[#allocation5 + $0x370] sm:$0xff]
    %v207 = vld [vmem:[#allocation5 + $0x378] sm:$0xff]
    %v208 = vld [vmem:[#allocation5 + $0x380] sm:$0xff]
    %v209 = vld [vmem:[#allocation5 + $0x388] sm:$0xff]
    %v210 = vld [vmem:[#allocation5 + $0x390] sm:$0xff]
    %v211 = vld [vmem:[#allocation5 + $0x398] sm:$0xff]
    %v212 = vld [vmem:[#allocation5 + $0x3a0] sm:$0xff]
    %v213 = vld [vmem:[#allocation5 + $0x3a8] sm:$0xff]
    %v214 = vld [vmem:[#allocation5 + $0x3b0] sm:$0xff]
    %v215 = vld [vmem:[#allocation5 + $0x3b8] sm:$0xff]
    %v216 = vld [vmem:[#allocation5 + $0x3c0] sm:$0xff]
    %v217 = vld [vmem:[#allocation5 + $0x3c8] sm:$0xff]
    %v218 = vld [vmem:[#allocation5 + $0x3d0] sm:$0xff]
    %v219 = vld [vmem:[#allocation5 + $0x3d8] sm:$0xff]
    %v220 = vld [vmem:[#allocation5 + $0x3e0] sm:$0xff]
    %v221 = vld [vmem:[#allocation5 + $0x3e8] sm:$0xff]
    %v222 = vld [vmem:[#allocation5 + $0x3f0] sm:$0xff]
    %v223 = vld [vmem:[#allocation5 + $0x3f8] sm:$0xff]
    %v224 = vld [vmem:[#allocation5 + $0x400] sm:$0xff]
    %v225 = vld [vmem:[#allocation5 + $0x408] sm:$0xff]
    %v226 = vld [vmem:[#allocation5 + $0x410] sm:$0xff]
    %v227 = vld [vmem:[#allocation5 + $0x418] sm:$0xff]
    %v228 = vld [vmem:[#allocation5 + $0x420] sm:$0xff]
    %v229 = vld [vmem:[#allocation5 + $0x428] sm:$0xff]
    %v230 = vld [vmem:[#allocation5 + $0x430] sm:$0xff]
    %v231 = vld [vmem:[#allocation5 + $0x438] sm:$0xff]
    %v232 = vld [vmem:[#allocation5 + $0x440] sm:$0xff]
    %v233 = vld [vmem:[#allocation5 + $0x448] sm:$0xff]
    %v234 = vld [vmem:[#allocation5 + $0x450] sm:$0xff]
    %v235 = vld [vmem:[#allocation5 + $0x458] sm:$0xff]
    %v236 = vld [vmem:[#allocation5 + $0x460] sm:$0xff]
    %v237 = vld [vmem:[#allocation5 + $0x468] sm:$0xff]
    %v238 = vld [vmem:[#allocation5 + $0x470] sm:$0xff]
    %v239 = vld [vmem:[#allocation5 + $0x478] sm:$0xff]
    %v240 = vld [vmem:[#allocation5 + $0x480] sm:$0xff]
    %v241 = vld [vmem:[#allocation5 + $0x488] sm:$0xff]
    %v242 = vld [vmem:[#allocation5 + $0x490] sm:$0xff]
    %v243 = vld [vmem:[#allocation5 + $0x498] sm:$0xff]
    %v244 = vld [vmem:[#allocation5 + $0x4a0] sm:$0xff]
    %v245 = vld [vmem:[#allocation5 + $0x4a8] sm:$0xff]
    %v246 = vld [vmem:[#allocation5 + $0x4b0] sm:$0xff]
    %v247 = vld [vmem:[#allocation5 + $0x4b8] sm:$0xff]
    %v248 = vld [vmem:[#allocation5 + $0x4c0] sm:$0xff]
    %v249 = vld [vmem:[#allocation5 + $0x4c8] sm:$0xff]
    %v250 = vld [vmem:[#allocation5 + $0x4d0] sm:$0xff]
    %v251 = vld [vmem:[#allocation5 + $0x4d8] sm:$0xff]
    %v252 = vld [vmem:[#allocation5 + $0x4e0] sm:$0xff]
    %v253 = vld [vmem:[#allocation5 + $0x4e8] sm:$0xff]
    %v254 = vld [vmem:[#allocation5 + $0x4f0] sm:$0xff]
    %v255 = vld [vmem:[#allocation5 + $0x4f8] sm:$0xff]
    %v256 = vld [vmem:[#allocation5 + $0x500] sm:$0xff]
    %v257 = vld [vmem:[#allocation5 + $0x508] sm:$0xff]
    %v258 = vld [vmem:[#allocation5 + $0x510] sm:$0xff]
    %v259 = vld [vmem:[#allocation5 + $0x518] sm:$0xff]
    %v260 = vld [vmem:[#allocation5 + $0x520] sm:$0xff]
    %v261 = vld [vmem:[#allocation5 + $0x528] sm:$0xff]
    %v262 = vld [vmem:[#allocation5 + $0x530] sm:$0xff]
    %v263 = vld [vmem:[#allocation5 + $0x538] sm:$0xff]
    %v264 = vld [vmem:[#allocation5 + $0x540] sm:$0xff]
    %v265 = vld [vmem:[#allocation5 + $0x548] sm:$0xff]
    %v266 = vld [vmem:[#allocation5 + $0x550] sm:$0xff]
    %v267 = vld [vmem:[#allocation5 + $0x558] sm:$0xff]
    %v268 = vld [vmem:[#allocation5 + $0x560] sm:$0xff]
    %v269 = vld [vmem:[#allocation5 + $0x568] sm:$0xff]
    %v270 = vld [vmem:[#allocation5 + $0x570] sm:$0xff]
    %v271 = vld [vmem:[#allocation5 + $0x578] sm:$0xff]
    %v272 = vld [vmem:[#allocation5 + $0x580] sm:$0xff]
    %v273 = vld [vmem:[#allocation5 + $0x588] sm:$0xff]
    %v274 = vld [vmem:[#allocation5 + $0x590] sm:$0xff]
    %v275 = vld [vmem:[#allocation5 + $0x598] sm:$0xff]
    %v276 = vld [vmem:[#allocation5 + $0x5a0] sm:$0xff]
    %v277 = vld [vmem:[#allocation5 + $0x5a8] sm:$0xff]
    %v278 = vld [vmem:[#allocation5 + $0x5b0] sm:$0xff]
    %v279 = vld [vmem:[#allocation5 + $0x5b8] sm:$0xff]
    %v280 = vld [vmem:[#allocation5 + $0x5c0] sm:$0xff]
    %v281 = vld [vmem:[#allocation5 + $0x5c8] sm:$0xff]
    %v282 = vld [vmem:[#allocation5 + $0x5d0] sm:$0xff]
    %v283 = vld [vmem:[#allocation5 + $0x5d8] sm:$0xff]
    %v284 = vld [vmem:[#allocation5 + $0x5e0] sm:$0xff]
    %v285 = vld [vmem:[#allocation5 + $0x5e8] sm:$0xff]
    %v286 = vld [vmem:[#allocation5 + $0x5f0] sm:$0xff]
    %v287 = vld [vmem:[#allocation5 + $0x5f8] sm:$0xff]
    %v288 = vld [vmem:[#allocation5 + $0x600] sm:$0xff]
    %v289 = vld [vmem:[#allocation5 + $0x608] sm:$0xff]
    %v290 = vld [vmem:[#allocation5 + $0x610] sm:$0xff]
    %v291 = vld [vmem:[#allocation5 + $0x618] sm:$0xff]
    %v292 = vld [vmem:[#allocation5 + $0x620] sm:$0xff]
    %v293 = vld [vmem:[#allocation5 + $0x628] sm:$0xff]
    %v294 = vld [vmem:[#allocation5 + $0x630] sm:$0xff]
    %v295 = vld [vmem:[#allocation5 + $0x638] sm:$0xff]
    %v296 = vld [vmem:[#allocation5 + $0x640] sm:$0xff]
    %v297 = vld [vmem:[#allocation5 + $0x648] sm:$0xff]
    %v298 = vld [vmem:[#allocation5 + $0x650] sm:$0xff]
    %v299 = vld [vmem:[#allocation5 + $0x658] sm:$0xff]
    %v300 = vld [vmem:[#allocation5 + $0x660] sm:$0xff]
    %v301 = vld [vmem:[#allocation5 + $0x668] sm:$0xff]
    %v302 = vld [vmem:[#allocation5 + $0x670] sm:$0xff]
    %v303 = vld [vmem:[#allocation5 + $0x678] sm:$0xff]
    %v304 = vld [vmem:[#allocation5 + $0x680] sm:$0xff]
    %v305 = vld [vmem:[#allocation5 + $0x688] sm:$0xff]
    %v306 = vld [vmem:[#allocation5 + $0x690] sm:$0xff]
    %v307 = vld [vmem:[#allocation5 + $0x698] sm:$0xff]
    %v308 = vld [vmem:[#allocation5 + $0x6a0] sm:$0xff]
    %v309 = vld [vmem:[#allocation5 + $0x6a8] sm:$0xff]
    %v310 = vld [vmem:[#allocation5 + $0x6b0] sm:$0xff]
    %v311 = vld [vmem:[#allocation5 + $0x6b8] sm:$0xff]
    %v312 = vld [vmem:[#allocation5 + $0x6c0] sm:$0xff]
    %v313 = vld [vmem:[#allocation5 + $0x6c8] sm:$0xff]
    %v314 = vld [vmem:[#allocation5 + $0x6d0] sm:$0xff]
    %v315 = vld [vmem:[#allocation5 + $0x6d8] sm:$0xff]
    %v316 = vld [vmem:[#allocation5 + $0x6e0] sm:$0xff]
    %v317 = vld [vmem:[#allocation5 + $0x6e8] sm:$0xff]
    %v318 = vld [vmem:[#allocation5 + $0x6f0] sm:$0xff]
    %v319 = vld [vmem:[#allocation5 + $0x6f8] sm:$0xff]
    %v320 = vld [vmem:[#allocation5 + $0x700] sm:$0xff]
    %v321 = vld [vmem:[#allocation5 + $0x708] sm:$0xff]
    %v322 = vld [vmem:[#allocation5 + $0x710] sm:$0xff]
    %v323 = vld [vmem:[#allocation5 + $0x718] sm:$0xff]
    %v324 = vld [vmem:[#allocation5 + $0x720] sm:$0xff]
    %v325 = vld [vmem:[#allocation5 + $0x728] sm:$0xff]
    %v326 = vld [vmem:[#allocation5 + $0x730] sm:$0xff]
    %v327 = vld [vmem:[#allocation5 + $0x738] sm:$0xff]
    %v328 = vld [vmem:[#allocation5 + $0x740] sm:$0xff]
    %v329 = vld [vmem:[#allocation5 + $0x748] sm:$0xff]
    %v330 = vld [vmem:[#allocation5 + $0x750] sm:$0xff]
    %v331 = vld [vmem:[#allocation5 + $0x758] sm:$0xff]
    %v332 = vld [vmem:[#allocation5 + $0x760] sm:$0xff]
    %v333 = vld [vmem:[#allocation5 + $0x768] sm:$0xff]
    %v334 = vld [vmem:[#allocation5 + $0x770] sm:$0xff]
    %v335 = vld [vmem:[#allocation5 + $0x778] sm:$0xff]
    %v336 = vld [vmem:[#allocation5 + $0x780] sm:$0xff]
    %v337 = vld [vmem:[#allocation5 + $0x788] sm:$0xff]
    %v338 = vld [vmem:[#allocation5 + $0x790] sm:$0xff]
    %v339 = vld [vmem:[#allocation5 + $0x798] sm:$0xff]
    %v340 = vld [vmem:[#allocation5 + $0x7a0] sm:$0xff]
    %v341 = vld [vmem:[#allocation5 + $0x7a8] sm:$0xff]
    %v342 = vld [vmem:[#allocation5 + $0x7b0] sm:$0xff]
    %v343 = vld [vmem:[#allocation5 + $0x7b8] sm:$0xff]
    %v344 = vld [vmem:[#allocation5 + $0x7c0] sm:$0xff]
    %v345 = vld [vmem:[#allocation5 + $0x7c8] sm:$0xff]
    %v346 = vld [vmem:[#allocation5 + $0x7d0] sm:$0xff]
    %v347 = vld [vmem:[#allocation5 + $0x7d8] sm:$0xff]
    %v348 = vld [vmem:[#allocation5 + $0x7e0] sm:$0xff]
    %v349 = vld [vmem:[#allocation5 + $0x7e8] sm:$0xff]
    %v350 = vld [vmem:[#allocation5 + $0x7f0] sm:$0xff]
    %v351 = vld [vmem:[#allocation5 + $0x7f8] sm:$0xff]
    %v352 = vld [vmem:[#allocation5 + $0x800] sm:$0xff]
    %v353 = vld [vmem:[#allocation5 + $0x808] sm:$0xff]
    %v354 = vld [vmem:[#allocation5 + $0x810] sm:$0xff]
    %v355 = vld [vmem:[#allocation5 + $0x818] sm:$0xff]
    %v356 = vld [vmem:[#allocation5 + $0x820] sm:$0xff]
    %v357 = vld [vmem:[#allocation5 + $0x828] sm:$0xff]
    %v358 = vld [vmem:[#allocation5 + $0x830] sm:$0xff]
    %v359 = vld [vmem:[#allocation5 + $0x838] sm:$0xff]
    %v360 = vld [vmem:[#allocation5 + $0x840] sm:$0xff]
    %v361 = vld [vmem:[#allocation5 + $0x848] sm:$0xff]
    %v362 = vld [vmem:[#allocation5 + $0x850] sm:$0xff]
    %v363 = vld [vmem:[#allocation5 + $0x858] sm:$0xff]
    %v364 = vld [vmem:[#allocation5 + $0x860] sm:$0xff]
    %v365 = vld [vmem:[#allocation5 + $0x868] sm:$0xff]
    %v366 = vld [vmem:[#allocation5 + $0x870] sm:$0xff]
    %v367 = vld [vmem:[#allocation5 + $0x878] sm:$0xff]
    %v368 = vld [vmem:[#allocation5 + $0x880] sm:$0xff]
    %v369 = vld [vmem:[#allocation5 + $0x888] sm:$0xff]
    %v370 = vld [vmem:[#allocation5 + $0x890] sm:$0xff]
    %v371 = vld [vmem:[#allocation5 + $0x898] sm:$0xff]
    %v372 = vld [vmem:[#allocation5 + $0x8a0] sm:$0xff]
    %v373 = vld [vmem:[#allocation5 + $0x8a8] sm:$0xff]
    %v374 = vld [vmem:[#allocation5 + $0x8b0] sm:$0xff]
    %v375 = vld [vmem:[#allocation5 + $0x8b8] sm:$0xff]
    %v376 = vld [vmem:[#allocation5 + $0x8c0] sm:$0xff]
    %v377 = vld [vmem:[#allocation5 + $0x8c8] sm:$0xff]
    %v378 = vld [vmem:[#allocation5 + $0x8d0] sm:$0xff]
    %v379 = vld [vmem:[#allocation5 + $0x8d8] sm:$0xff]
    %v380 = vld [vmem:[#allocation5 + $0x8e0] sm:$0xff]
    %v381 = vld [vmem:[#allocation5 + $0x8e8] sm:$0xff]
    %v382 = vld [vmem:[#allocation5 + $0x8f0] sm:$0xff]
    %v383 = vld [vmem:[#allocation5 + $0x8f8] sm:$0xff]
    %v384 = vld [vmem:[#allocation5 + $0x900] sm:$0xff]
    %v385 = vld [vmem:[#allocation5 + $0x908] sm:$0xff]
    %v386 = vld [vmem:[#allocation5 + $0x910] sm:$0xff]
    %v387 = vld [vmem:[#allocation5 + $0x918] sm:$0xff]
    %v388 = vld [vmem:[#allocation5 + $0x920] sm:$0xff]
    %v389 = vld [vmem:[#allocation5 + $0x928] sm:$0xff]
    %v390 = vld [vmem:[#allocation5 + $0x930] sm:$0xff]
    %v391 = vld [vmem:[#allocation5 + $0x938] sm:$0xff]
    %v392 = vld [vmem:[#allocation5 + $0x940] sm:$0xff]
    %v393 = vld [vmem:[#allocation5 + $0x948] sm:$0xff]
    %v394 = vld [vmem:[#allocation5 + $0x950] sm:$0xff]
    %v395 = vld [vmem:[#allocation5 + $0x958] sm:$0xff]
    %v396 = vld [vmem:[#allocation5 + $0x960] sm:$0xff]
    %v397 = vld [vmem:[#allocation5 + $0x968] sm:$0xff]
    %v398 = vld [vmem:[#allocation5 + $0x970] sm:$0xff]
    %v399 = vld [vmem:[#allocation5 + $0x978] sm:$0xff]
    %v400 = vld [vmem:[#allocation5 + $0x980] sm:$0xff]
    %v401 = vld [vmem:[#allocation5 + $0x988] sm:$0xff]
    %v402 = vld [vmem:[#allocation5 + $0x990] sm:$0xff]
    %v403 = vld [vmem:[#allocation5 + $0x998] sm:$0xff]
    %v404 = vld [vmem:[#allocation5 + $0x9a0] sm:$0xff]
    %v405 = vld [vmem:[#allocation5 + $0x9a8] sm:$0xff]
    %v406 = vld [vmem:[#allocation5 + $0x9b0] sm:$0xff]
    %v407 = vld [vmem:[#allocation5 + $0x9b8] sm:$0xff]
    %v408 = vld [vmem:[#allocation5 + $0x9c0] sm:$0xff]
    %v409 = vld [vmem:[#allocation5 + $0x9c8] sm:$0xff]
    %v410 = vld [vmem:[#allocation5 + $0x9d0] sm:$0xff]
    %v411 = vld [vmem:[#allocation5 + $0x9d8] sm:$0xff]
    %v412 = vld [vmem:[#allocation5 + $0x9e0] sm:$0xff]
    %v413 = vld [vmem:[#allocation5 + $0x9e8] sm:$0xff]
    %v414 = vld [vmem:[#allocation5 + $0x9f0] sm:$0xff]
    %v415 = vld [vmem:[#allocation5 + $0x9f8] sm:$0xff]
    %v416 = vld [vmem:[#allocation5 + $0xa00] sm:$0xff]
    %v417 = vld [vmem:[#allocation5 + $0xa08] sm:$0xff]
    %v418 = vld [vmem:[#allocation5 + $0xa10] sm:$0xff]
    %v419 = vld [vmem:[#allocation5 + $0xa18] sm:$0xff]
    %v420 = vld [vmem:[#allocation5 + $0xa20] sm:$0xff]
    %v421 = vld [vmem:[#allocation5 + $0xa28] sm:$0xff]
    %v422 = vld [vmem:[#allocation5 + $0xa30] sm:$0xff]
    %v423 = vld [vmem:[#allocation5 + $0xa38] sm:$0xff]
    %v424 = vld [vmem:[#allocation5 + $0xa40] sm:$0xff]
    %v425 = vld [vmem:[#allocation5 + $0xa48] sm:$0xff]
    %v426 = vld [vmem:[#allocation5 + $0xa50] sm:$0xff]
    %v427 = vld [vmem:[#allocation5 + $0xa58] sm:$0xff]
    %v428 = vld [vmem:[#allocation5 + $0xa60] sm:$0xff]
    %v429 = vld [vmem:[#allocation5 + $0xa68] sm:$0xff]
    %v430 = vld [vmem:[#allocation5 + $0xa70] sm:$0xff]
    %v431 = vld [vmem:[#allocation5 + $0xa78] sm:$0xff]
    %v432 = vld [vmem:[#allocation5 + $0xa80] sm:$0xff]
    %v433 = vld [vmem:[#allocation5 + $0xa88] sm:$0xff]
    %v434 = vld [vmem:[#allocation5 + $0xa90] sm:$0xff]
    %v435 = vld [vmem:[#allocation5 + $0xa98] sm:$0xff]
    %v436 = vld [vmem:[#allocation5 + $0xaa0] sm:$0xff]
    %v437 = vld [vmem:[#allocation5 + $0xaa8] sm:$0xff]
    %v438 = vld [vmem:[#allocation5 + $0xab0] sm:$0xff]
    %v439 = vld [vmem:[#allocation5 + $0xab8] sm:$0xff]
    %v440 = vld [vmem:[#allocation5 + $0xac0] sm:$0xff]
    %v441 = vld [vmem:[#allocation5 + $0xac8] sm:$0xff]
    %v442 = vld [vmem:[#allocation5 + $0xad0] sm:$0xff]
    %v443 = vld [vmem:[#allocation5 + $0xad8] sm:$0xff]
    %v444 = vld [vmem:[#allocation5 + $0xae0] sm:$0xff]
    %v445 = vld [vmem:[#allocation5 + $0xae8] sm:$0xff]
    %v446 = vld [vmem:[#allocation5 + $0xaf0] sm:$0xff]
    %v447 = vld [vmem:[#allocation5 + $0xaf8] sm:$0xff]
    %v448 = vld [vmem:[#allocation5 + $0xb00] sm:$0xff]
    %v449 = vld [vmem:[#allocation5 + $0xb08] sm:$0xff]
    %v450 = vld [vmem:[#allocation5 + $0xb10] sm:$0xff]
    %v451 = vld [vmem:[#allocation5 + $0xb18] sm:$0xff]
    %v452 = vld [vmem:[#allocation5 + $0xb20] sm:$0xff]
    %v453 = vld [vmem:[#allocation5 + $0xb28] sm:$0xff]
    %v454 = vld [vmem:[#allocation5 + $0xb30] sm:$0xff]
    %v455 = vld [vmem:[#allocation5 + $0xb38] sm:$0xff]
    %v456 = vld [vmem:[#allocation5 + $0xb40] sm:$0xff]
    %v457 = vld [vmem:[#allocation5 + $0xb48] sm:$0xff]
    %v458 = vld [vmem:[#allocation5 + $0xb50] sm:$0xff]
    %v459 = vld [vmem:[#allocation5 + $0xb58] sm:$0xff]
    %v460 = vld [vmem:[#allocation5 + $0xb60] sm:$0xff]
    %v461 = vld [vmem:[#allocation5 + $0xb68] sm:$0xff]
    %v462 = vld [vmem:[#allocation5 + $0xb70] sm:$0xff]
    %v463 = vld [vmem:[#allocation5 + $0xb78] sm:$0xff]
    %v464 = vld [vmem:[#allocation5 + $0xb80] sm:$0xff]
    %v465 = vld [vmem:[#allocation5 + $0xb88] sm:$0xff]
    %v466 = vld [vmem:[#allocation5 + $0xb90] sm:$0xff]
    %v467 = vld [vmem:[#allocation5 + $0xb98] sm:$0xff]
    %v468 = vld [vmem:[#allocation5 + $0xba0] sm:$0xff]
    %v469 = vld [vmem:[#allocation5 + $0xba8] sm:$0xff]
    %v470 = vld [vmem:[#allocation5 + $0xbb0] sm:$0xff]
    %v471 = vld [vmem:[#allocation5 + $0xbb8] sm:$0xff]
    %v472 = vld [vmem:[#allocation5 + $0xbc0] sm:$0xff]
    %v473 = vld [vmem:[#allocation5 + $0xbc8] sm:$0xff]
    %v474 = vld [vmem:[#allocation5 + $0xbd0] sm:$0xff]
    %v475 = vld [vmem:[#allocation5 + $0xbd8] sm:$0xff]
    %v476 = vld [vmem:[#allocation5 + $0xbe0] sm:$0xff]
    %v477 = vld [vmem:[#allocation5 + $0xbe8] sm:$0xff]
    %v478 = vld [vmem:[#allocation5 + $0xbf0] sm:$0xff]
    %v479 = vld [vmem:[#allocation5 + $0xbf8] sm:$0xff]
    %v480 = vld [vmem:[#allocation5 + $0xc00] sm:$0xff]
    %v481 = vld [vmem:[#allocation5 + $0xc08] sm:$0xff]
    %v482 = vld [vmem:[#allocation5 + $0xc10] sm:$0xff]
    %v483 = vld [vmem:[#allocation5 + $0xc18] sm:$0xff]
    %v484 = vld [vmem:[#allocation5 + $0xc20] sm:$0xff]
    %v485 = vld [vmem:[#allocation5 + $0xc28] sm:$0xff]
    %v486 = vld [vmem:[#allocation5 + $0xc30] sm:$0xff]
    %v487 = vld [vmem:[#allocation5 + $0xc38] sm:$0xff]
    %v488 = vld [vmem:[#allocation5 + $0xc40] sm:$0xff]
    %v489 = vld [vmem:[#allocation5 + $0xc48] sm:$0xff]
    %v490 = vld [vmem:[#allocation5 + $0xc50] sm:$0xff]
    %v491 = vld [vmem:[#allocation5 + $0xc58] sm:$0xff]
    %v492 = vld [vmem:[#allocation5 + $0xc60] sm:$0xff]
    %v493 = vld [vmem:[#allocation5 + $0xc68] sm:$0xff]
    %v494 = vld [vmem:[#allocation5 + $0xc70] sm:$0xff]
    %v495 = vld [vmem:[#allocation5 + $0xc78] sm:$0xff]
    %v496 = vld [vmem:[#allocation5 + $0xc80] sm:$0xff]
    %v497 = vld [vmem:[#allocation5 + $0xc88] sm:$0xff]
    %v498 = vld [vmem:[#allocation5 + $0xc90] sm:$0xff]
    %v499 = vld [vmem:[#allocation5 + $0xc98] sm:$0xff]
    %v500 = vld [vmem:[#allocation5 + $0xca0] sm:$0xff]
    %v501 = vld [vmem:[#allocation5 + $0xca8] sm:$0xff]
    %v502 = vld [vmem:[#allocation5 + $0xcb0] sm:$0xff]
    %v503 = vld [vmem:[#allocation5 + $0xcb8] sm:$0xff]
    %v504 = vld [vmem:[#allocation5 + $0xcc0] sm:$0xff]
    %v505 = vld [vmem:[#allocation5 + $0xcc8] sm:$0xff]
    %v506 = vld [vmem:[#allocation5 + $0xcd0] sm:$0xff]
    %v507 = vld [vmem:[#allocation5 + $0xcd8] sm:$0xff]
    %v508 = vld [vmem:[#allocation5 + $0xce0] sm:$0xff]
    %v509 = vld [vmem:[#allocation5 + $0xce8] sm:$0xff]
    %v510 = vld [vmem:[#allocation5 + $0xcf0] sm:$0xff]
    %v511 = vld [vmem:[#allocation5 + $0xcf8] sm:$0xff]
    %v512 = vld [vmem:[#allocation5 + $0xd00] sm:$0xff]
    %v513 = vld [vmem:[#allocation5 + $0xd08] sm:$0xff]
    %v514 = vld [vmem:[#allocation5 + $0xd10] sm:$0xff]
    %v515 = vld [vmem:[#allocation5 + $0xd18] sm:$0xff]
    %v516 = vld [vmem:[#allocation5 + $0xd20] sm:$0xff]
    %v517 = vld [vmem:[#allocation5 + $0xd28] sm:$0xff]
    %v518 = vld [vmem:[#allocation5 + $0xd30] sm:$0xff]
    %v519 = vld [vmem:[#allocation5 + $0xd38] sm:$0xff]
    %v520 = vld [vmem:[#allocation5 + $0xd40] sm:$0xff]
    %v521 = vld [vmem:[#allocation5 + $0xd48] sm:$0xff]
    %v522 = vld [vmem:[#allocation5 + $0xd50] sm:$0xff]
    %v523 = vld [vmem:[#allocation5 + $0xd58] sm:$0xff]
    %v524 = vld [vmem:[#allocation5 + $0xd60] sm:$0xff]
    %v525 = vld [vmem:[#allocation5 + $0xd68] sm:$0xff]
    %v526 = vld [vmem:[#allocation5 + $0xd70] sm:$0xff]
    %v527 = vld [vmem:[#allocation5 + $0xd78] sm:$0xff]
    %v528 = vld [vmem:[#allocation5 + $0xd80] sm:$0xff]
    %v529 = vld [vmem:[#allocation5 + $0xd88] sm:$0xff]
    %v530 = vld [vmem:[#allocation5 + $0xd90] sm:$0xff]
    %v531 = vld [vmem:[#allocation5 + $0xd98] sm:$0xff]
    %v532 = vld [vmem:[#allocation5 + $0xda0] sm:$0xff]
    %v533 = vld [vmem:[#allocation5 + $0xda8] sm:$0xff]
    %v534 = vld [vmem:[#allocation5 + $0xdb0] sm:$0xff]
    %v535 = vld [vmem:[#allocation5 + $0xdb8] sm:$0xff]
    %v536 = vld [vmem:[#allocation5 + $0xdc0] sm:$0xff]
    %v537 = vld [vmem:[#allocation5 + $0xdc8] sm:$0xff]
    %v538 = vld [vmem:[#allocation5 + $0xdd0] sm:$0xff]
    %v539 = vld [vmem:[#allocation5 + $0xdd8] sm:$0xff]
    %v540 = vld [vmem:[#allocation5 + $0xde0] sm:$0xff]
    %v541 = vld [vmem:[#allocation5 + $0xde8] sm:$0xff]
    %v542 = vld [vmem:[#allocation5 + $0xdf0] sm:$0xff]
    %v543 = vld [vmem:[#allocation5 + $0xdf8] sm:$0xff]
    %v544 = vld [vmem:[#allocation5 + $0xe00] sm:$0xff]
    %v545 = vld [vmem:[#allocation5 + $0xe08] sm:$0xff]
    %v546 = vld [vmem:[#allocation5 + $0xe10] sm:$0xff]
    %v547 = vld [vmem:[#allocation5 + $0xe18] sm:$0xff]
    %v548 = vld [vmem:[#allocation5 + $0xe20] sm:$0xff]
    %v549 = vld [vmem:[#allocation5 + $0xe28] sm:$0xff]
    %v550 = vld [vmem:[#allocation5 + $0xe30] sm:$0xff]
    %v551 = vld [vmem:[#allocation5 + $0xe38] sm:$0xff]
    %v552 = vld [vmem:[#allocation5 + $0xe40] sm:$0xff]
    %v553 = vld [vmem:[#allocation5 + $0xe48] sm:$0xff]
    %v554 = vld [vmem:[#allocation5 + $0xe50] sm:$0xff]
    %v555 = vld [vmem:[#allocation5 + $0xe58] sm:$0xff]
    %v556 = vld [vmem:[#allocation5 + $0xe60] sm:$0xff]
    %v557 = vld [vmem:[#allocation5 + $0xe68] sm:$0xff]
    %v558 = vld [vmem:[#allocation5 + $0xe70] sm:$0xff]
    %v559 = vld [vmem:[#allocation5 + $0xe78] sm:$0xff]
    %v560 = vld [vmem:[#allocation5 + $0xe80] sm:$0xff]
    %v561 = vld [vmem:[#allocation5 + $0xe88] sm:$0xff]
    %v562 = vld [vmem:[#allocation5 + $0xe90] sm:$0xff]
    %v563 = vld [vmem:[#allocation5 + $0xe98] sm:$0xff]
    %v564 = vld [vmem:[#allocation5 + $0xea0] sm:$0xff]
    %v565 = vld [vmem:[#allocation5 + $0xea8] sm:$0xff]
    %v566 = vld [vmem:[#allocation5 + $0xeb0] sm:$0xff]
    %v567 = vld [vmem:[#allocation5 + $0xeb8] sm:$0xff]
    %v568 = vld [vmem:[#allocation5 + $0xec0] sm:$0xff]
    %v569 = vld [vmem:[#allocation5 + $0xec8] sm:$0xff]
    %v570 = vld [vmem:[#allocation5 + $0xed0] sm:$0xff]
    %v571 = vld [vmem:[#allocation5 + $0xed8] sm:$0xff]
    %v572 = vld [vmem:[#allocation5 + $0xee0] sm:$0xff]
    %v573 = vld [vmem:[#allocation5 + $0xee8] sm:$0xff]
    %v574 = vld [vmem:[#allocation5 + $0xef0] sm:$0xff]
    %v575 = vld [vmem:[#allocation5 + $0xef8] sm:$0xff]
    %v576 = vld [vmem:[#allocation5 + $0xf00] sm:$0xff]
    %v577 = vld [vmem:[#allocation5 + $0xf08] sm:$0xff]
    %v578 = vld [vmem:[#allocation5 + $0xf10] sm:$0xff]
    %v579 = vld [vmem:[#allocation5 + $0xf18] sm:$0xff]
    %v580 = vld [vmem:[#allocation5 + $0xf20] sm:$0xff]
    %v581 = vld [vmem:[#allocation5 + $0xf28] sm:$0xff]
    %v582 = vld [vmem:[#allocation5 + $0xf30] sm:$0xff]
    %v583 = vld [vmem:[#allocation5 + $0xf38] sm:$0xff]
    %v584 = vld [vmem:[#allocation5 + $0xf40] sm:$0xff]
    %v585 = vld [vmem:[#allocation5 + $0xf48] sm:$0xff]
    %v586 = vld [vmem:[#allocation5 + $0xf50] sm:$0xff]
    %v587 = vld [vmem:[#allocation5 + $0xf58] sm:$0xff]
    %v588 = vld [vmem:[#allocation5 + $0xf60] sm:$0xff]
    %v589 = vld [vmem:[#allocation5 + $0xf68] sm:$0xff]
    %v590 = vld [vmem:[#allocation5 + $0xf70] sm:$0xff]
    %v591 = vld [vmem:[#allocation5 + $0xf78] sm:$0xff]
    %v592 = vld [vmem:[#allocation5 + $0xf80] sm:$0xff]
    %v593 = vld [vmem:[#allocation5 + $0xf88] sm:$0xff]
    %v594 = vld [vmem:[#allocation5 + $0xf90] sm:$0xff]
    %v595 = vld [vmem:[#allocation5 + $0xf98] sm:$0xff]
    %v596 = vld [vmem:[#allocation5 + $0xfa0] sm:$0xff]
    %v597 = vld [vmem:[#allocation5 + $0xfa8] sm:$0xff]
    %v598 = vld [vmem:[#allocation5 + $0xfb0] sm:$0xff]
    %v599 = vld [vmem:[#allocation5 + $0xfb8] sm:$0xff]
    %v600 = vld [vmem:[#allocation5 + $0xfc0] sm:$0xff]
    %v601 = vld [vmem:[#allocation5 + $0xfc8] sm:$0xff]
    %v602 = vld [vmem:[#allocation5 + $0xfd0] sm:$0xff]
    %v603 = vld [vmem:[#allocation5 + $0xfd8] sm:$0xff]
    %v604 = vld [vmem:[#allocation5 + $0xfe0] sm:$0xff]
    %v605 = vld [vmem:[#allocation5 + $0xfe8] sm:$0xff]
    %v606 = vld [vmem:[#allocation5 + $0xff0] sm:$0xff]
    %v607 = vld [vmem:[#allocation5 + $0xff8] sm:$0xff]
    %608 = vmatpush.msra.mxu0 %v576
    %609 = vmatpush.msra.mxu0 %v544
    %610 = vmatpush.msra.mxu0 %v512
    %611 = vmatpush.msra.mxu0 %v480
    %612 = vmatpush.msra.mxu0 %v448
    %613 = vmatpush.msra.mxu0 %v416
    %614 = vmatpush.msra.mxu0 %v384
    %615 = vmatpush.msra.mxu0 %v352
    %616 = vmatpush.msra.mxu0 %v320
    %617 = vmatpush.msra.mxu0 %v288
    %618 = vmatpush.msra.mxu0 %v256
    %619 = vmatpush.msra.mxu0 %v224
    %620 = vmatpush.msra.mxu0 %v192
    %621 = vmatpush.msra.mxu0 %v160
    %622 = vmatpush.msra.mxu0 %v128
    %623 = vmatpush.msra.mxu0 %v96
    %624 = vmatmul.f32.gmra.mxu0 %v95
    %v625 = vpop.f32.mrf.mxu0
    %v626 = vadd.f32 0.0, %v625
    %627 = vdwg.mxu0
    %628 = vmatpush.msra.mxu0 %v577
    %629 = vmatpush.msra.mxu0 %v545
    %630 = vmatpush.msra.mxu0 %v513
    %631 = vmatpush.msra.mxu0 %v481
    %632 = vmatpush.msra.mxu0 %v449
    %633 = vmatpush.msra.mxu0 %v417
    %634 = vmatpush.msra.mxu0 %v385
    %635 = vmatpush.msra.mxu0 %v353
    %636 = vmatpush.msra.mxu0 %v321
    %637 = vmatpush.msra.mxu0 %v289
    %638 = vmatpush.msra.mxu0 %v257
    %639 = vmatpush.msra.mxu0 %v225
    %640 = vmatpush.msra.mxu0 %v193
    %641 = vmatpush.msra.mxu0 %v161
    %642 = vmatpush.msra.mxu0 %v129
    %643 = vmatpush.msra.mxu0 %v97
    %644 = vmatmul.f32.gmra.mxu0 %v95
    %v645 = vpop.f32.mrf.mxu0
    %v646 = vadd.f32 0.0, %v645
    %647 = vdwg.mxu0
    %648 = vmatpush.msra.mxu0 %v578
    %649 = vmatpush.msra.mxu0 %v546
    %650 = vmatpush.msra.mxu0 %v514
    %651 = vmatpush.msra.mxu0 %v482
    %652 = vmatpush.msra.mxu0 %v450
    %653 = vmatpush.msra.mxu0 %v418
    %654 = vmatpush.msra.mxu0 %v386
    %655 = vmatpush.msra.mxu0 %v354
    %656 = vmatpush.msra.mxu0 %v322
    %657 = vmatpush.msra.mxu0 %v290
    %658 = vmatpush.msra.mxu0 %v258
    %659 = vmatpush.msra.mxu0 %v226
    %660 = vmatpush.msra.mxu0 %v194
    %661 = vmatpush.msra.mxu0 %v162
    %662 = vmatpush.msra.mxu0 %v130
    %663 = vmatpush.msra.mxu0 %v98
    %664 = vmatmul.f32.gmra.mxu0 %v95
    %v665 = vpop.f32.mrf.mxu0
    %v666 = vadd.f32 0.0, %v665
    %667 = vdwg.mxu0
    %668 = vmatpush.msra.mxu0 %v579
    %669 = vmatpush.msra.mxu0 %v547
    %670 = vmatpush.msra.mxu0 %v515
    %671 = vmatpush.msra.mxu0 %v483
    %672 = vmatpush.msra.mxu0 %v451
    %673 = vmatpush.msra.mxu0 %v419
    %674 = vmatpush.msra.mxu0 %v387
    %675 = vmatpush.msra.mxu0 %v355
    %676 = vmatpush.msra.mxu0 %v323
    %677 = vmatpush.msra.mxu0 %v291
    %678 = vmatpush.msra.mxu0 %v259
    %679 = vmatpush.msra.mxu0 %v227
    %680 = vmatpush.msra.mxu0 %v195
    %681 = vmatpush.msra.mxu0 %v163
    %682 = vmatpush.msra.mxu0 %v131
    %683 = vmatpush.msra.mxu0 %v99
    %684 = vmatmul.f32.gmra.mxu0 %v95
    %v685 = vpop.f32.mrf.mxu0
    %v686 = vadd.f32 0.0, %v685
    %687 = vdwg.mxu0
    %688 = vmatpush.msra.mxu0 %v580
    %689 = vmatpush.msra.mxu0 %v548
    %690 = vmatpush.msra.mxu0 %v516
    %691 = vmatpush.msra.mxu0 %v484
    %692 = vmatpush.msra.mxu0 %v452
    %693 = vmatpush.msra.mxu0 %v420
    %694 = vmatpush.msra.mxu0 %v388
    %695 = vmatpush.msra.mxu0 %v356
    %696 = vmatpush.msra.mxu0 %v324
    %697 = vmatpush.msra.mxu0 %v292
    %698 = vmatpush.msra.mxu0 %v260
    %699 = vmatpush.msra.mxu0 %v228
    %700 = vmatpush.msra.mxu0 %v196
    %701 = vmatpush.msra.mxu0 %v164
    %702 = vmatpush.msra.mxu0 %v132
    %703 = vmatpush.msra.mxu0 %v100
    %704 = vmatmul.f32.gmra.mxu0 %v95
    %v705 = vpop.f32.mrf.mxu0
    %v706 = vadd.f32 0.0, %v705
    %707 = vdwg.mxu0
    %708 = vmatpush.msra.mxu0 %v581
    %709 = vmatpush.msra.mxu0 %v549
    %710 = vmatpush.msra.mxu0 %v517
    %711 = vmatpush.msra.mxu0 %v485
    %712 = vmatpush.msra.mxu0 %v453
    %713 = vmatpush.msra.mxu0 %v421
    %714 = vmatpush.msra.mxu0 %v389
    %715 = vmatpush.msra.mxu0 %v357
    %716 = vmatpush.msra.mxu0 %v325
    %717 = vmatpush.msra.mxu0 %v293
    %718 = vmatpush.msra.mxu0 %v261
    %719 = vmatpush.msra.mxu0 %v229
    %720 = vmatpush.msra.mxu0 %v197
    %721 = vmatpush.msra.mxu0 %v165
    %722 = vmatpush.msra.mxu0 %v133
    %723 = vmatpush.msra.mxu0 %v101
    %724 = vmatmul.f32.gmra.mxu0 %v95
    %v725 = vpop.f32.mrf.mxu0
    %v726 = vadd.f32 0.0, %v725
    %727 = vdwg.mxu0
    %728 = vmatpush.msra.mxu0 %v582
    %729 = vmatpush.msra.mxu0 %v550
    %730 = vmatpush.msra.mxu0 %v518
    %731 = vmatpush.msra.mxu0 %v486
    %732 = vmatpush.msra.mxu0 %v454
    %733 = vmatpush.msra.mxu0 %v422
    %734 = vmatpush.msra.mxu0 %v390
    %735 = vmatpush.msra.mxu0 %v358
    %736 = vmatpush.msra.mxu0 %v326
    %737 = vmatpush.msra.mxu0 %v294
    %738 = vmatpush.msra.mxu0 %v262
    %739 = vmatpush.msra.mxu0 %v230
    %740 = vmatpush.msra.mxu0 %v198
    %741 = vmatpush.msra.mxu0 %v166
    %742 = vmatpush.msra.mxu0 %v134
    %743 = vmatpush.msra.mxu0 %v102
    %744 = vmatmul.f32.gmra.mxu0 %v95
    %v745 = vpop.f32.mrf.mxu0
    %v746 = vadd.f32 0.0, %v745
    %747 = vdwg.mxu0
    %748 = vmatpush.msra.mxu0 %v583
    %749 = vmatpush.msra.mxu0 %v551
    %750 = vmatpush.msra.mxu0 %v519
    %751 = vmatpush.msra.mxu0 %v487
    %752 = vmatpush.msra.mxu0 %v455
    %753 = vmatpush.msra.mxu0 %v423
    %754 = vmatpush.msra.mxu0 %v391
    %755 = vmatpush.msra.mxu0 %v359
    %756 = vmatpush.msra.mxu0 %v327
    %757 = vmatpush.msra.mxu0 %v295
    %758 = vmatpush.msra.mxu0 %v263
    %759 = vmatpush.msra.mxu0 %v231
    %760 = vmatpush.msra.mxu0 %v199
    %761 = vmatpush.msra.mxu0 %v167
    %762 = vmatpush.msra.mxu0 %v135
    %763 = vmatpush.msra.mxu0 %v103
    %764 = vmatmul.f32.gmra.mxu0 %v95
    %v765 = vpop.f32.mrf.mxu0
    %v766 = vadd.f32 0.0, %v765
    %767 = vdwg.mxu0
    %768 = vmatpush.msra.mxu0 %v584
    %769 = vmatpush.msra.mxu0 %v552
    %770 = vmatpush.msra.mxu0 %v520
    %771 = vmatpush.msra.mxu0 %v488
    %772 = vmatpush.msra.mxu0 %v456
    %773 = vmatpush.msra.mxu0 %v424
    %774 = vmatpush.msra.mxu0 %v392
    %775 = vmatpush.msra.mxu0 %v360
    %776 = vmatpush.msra.mxu0 %v328
    %777 = vmatpush.msra.mxu0 %v296
    %778 = vmatpush.msra.mxu0 %v264
    %779 = vmatpush.msra.mxu0 %v232
    %780 = vmatpush.msra.mxu0 %v200
    %781 = vmatpush.msra.mxu0 %v168
    %782 = vmatpush.msra.mxu0 %v136
    %783 = vmatpush.msra.mxu0 %v104
    %784 = vmatmul.f32.gmra.mxu0 %v95
    %v785 = vpop.f32.mrf.mxu0
    %v786 = vadd.f32 0.0, %v785
    %787 = vdwg.mxu0
    %788 = vmatpush.msra.mxu0 %v585
    %789 = vmatpush.msra.mxu0 %v553
    %790 = vmatpush.msra.mxu0 %v521
    %791 = vmatpush.msra.mxu0 %v489
    %792 = vmatpush.msra.mxu0 %v457
    %793 = vmatpush.msra.mxu0 %v425
    %794 = vmatpush.msra.mxu0 %v393
    %795 = vmatpush.msra.mxu0 %v361
    %796 = vmatpush.msra.mxu0 %v329
    %797 = vmatpush.msra.mxu0 %v297
    %798 = vmatpush.msra.mxu0 %v265
    %799 = vmatpush.msra.mxu0 %v233
    %800 = vmatpush.msra.mxu0 %v201
    %801 = vmatpush.msra.mxu0 %v169
    %802 = vmatpush.msra.mxu0 %v137
    %803 = vmatpush.msra.mxu0 %v105
    %804 = vmatmul.f32.gmra.mxu0 %v95
    %v805 = vpop.f32.mrf.mxu0
    %v806 = vadd.f32 0.0, %v805
    %807 = vdwg.mxu0
    %808 = vmatpush.msra.mxu0 %v586
    %809 = vmatpush.msra.mxu0 %v554
    %810 = vmatpush.msra.mxu0 %v522
    %811 = vmatpush.msra.mxu0 %v490
    %812 = vmatpush.msra.mxu0 %v458
    %813 = vmatpush.msra.mxu0 %v426
    %814 = vmatpush.msra.mxu0 %v394
    %815 = vmatpush.msra.mxu0 %v362
    %816 = vmatpush.msra.mxu0 %v330
    %817 = vmatpush.msra.mxu0 %v298
    %818 = vmatpush.msra.mxu0 %v266
    %819 = vmatpush.msra.mxu0 %v234
    %820 = vmatpush.msra.mxu0 %v202
    %821 = vmatpush.msra.mxu0 %v170
    %822 = vmatpush.msra.mxu0 %v138
    %823 = vmatpush.msra.mxu0 %v106
    %824 = vmatmul.f32.gmra.mxu0 %v95
    %v825 = vpop.f32.mrf.mxu0
    %v826 = vadd.f32 0.0, %v825
    %827 = vdwg.mxu0
    %828 = vmatpush.msra.mxu0 %v587
    %829 = vmatpush.msra.mxu0 %v555
    %830 = vmatpush.msra.mxu0 %v523
    %831 = vmatpush.msra.mxu0 %v491
    %832 = vmatpush.msra.mxu0 %v459
    %833 = vmatpush.msra.mxu0 %v427
    %834 = vmatpush.msra.mxu0 %v395
    %835 = vmatpush.msra.mxu0 %v363
    %836 = vmatpush.msra.mxu0 %v331
    %837 = vmatpush.msra.mxu0 %v299
    %838 = vmatpush.msra.mxu0 %v267
    %839 = vmatpush.msra.mxu0 %v235
    %840 = vmatpush.msra.mxu0 %v203
    %841 = vmatpush.msra.mxu0 %v171
    %842 = vmatpush.msra.mxu0 %v139
    %843 = vmatpush.msra.mxu0 %v107
    %844 = vmatmul.f32.gmra.mxu0 %v95
    %v845 = vpop.f32.mrf.mxu0
    %v846 = vadd.f32 0.0, %v845
    %847 = vdwg.mxu0
    %848 = vmatpush.msra.mxu0 %v588
    %849 = vmatpush.msra.mxu0 %v556
    %850 = vmatpush.msra.mxu0 %v524
    %851 = vmatpush.msra.mxu0 %v492
    %852 = vmatpush.msra.mxu0 %v460
    %853 = vmatpush.msra.mxu0 %v428
    %854 = vmatpush.msra.mxu0 %v396
    %855 = vmatpush.msra.mxu0 %v364
    %856 = vmatpush.msra.mxu0 %v332
    %857 = vmatpush.msra.mxu0 %v300
    %858 = vmatpush.msra.mxu0 %v268
    %859 = vmatpush.msra.mxu0 %v236
    %860 = vmatpush.msra.mxu0 %v204
    %861 = vmatpush.msra.mxu0 %v172
    %862 = vmatpush.msra.mxu0 %v140
    %863 = vmatpush.msra.mxu0 %v108
    %864 = vmatmul.f32.gmra.mxu0 %v95
    %v865 = vpop.f32.mrf.mxu0
    %v866 = vadd.f32 0.0, %v865
    %867 = vdwg.mxu0
    %868 = vmatpush.msra.mxu0 %v589
    %869 = vmatpush.msra.mxu0 %v557
    %870 = vmatpush.msra.mxu0 %v525
    %871 = vmatpush.msra.mxu0 %v493
    %872 = vmatpush.msra.mxu0 %v461
    %873 = vmatpush.msra.mxu0 %v429
    %874 = vmatpush.msra.mxu0 %v397
    %875 = vmatpush.msra.mxu0 %v365
    %876 = vmatpush.msra.mxu0 %v333
    %877 = vmatpush.msra.mxu0 %v301
    %878 = vmatpush.msra.mxu0 %v269
    %879 = vmatpush.msra.mxu0 %v237
    %880 = vmatpush.msra.mxu0 %v205
    %881 = vmatpush.msra.mxu0 %v173
    %882 = vmatpush.msra.mxu0 %v141
    %883 = vmatpush.msra.mxu0 %v109
    %884 = vmatmul.f32.gmra.mxu0 %v95
    %v885 = vpop.f32.mrf.mxu0
    %v886 = vadd.f32 0.0, %v885
    %887 = vdwg.mxu0
    %888 = vmatpush.msra.mxu0 %v590
    %889 = vmatpush.msra.mxu0 %v558
    %890 = vmatpush.msra.mxu0 %v526
    %891 = vmatpush.msra.mxu0 %v494
    %892 = vmatpush.msra.mxu0 %v462
    %893 = vmatpush.msra.mxu0 %v430
    %894 = vmatpush.msra.mxu0 %v398
    %895 = vmatpush.msra.mxu0 %v366
    %896 = vmatpush.msra.mxu0 %v334
    %897 = vmatpush.msra.mxu0 %v302
    %898 = vmatpush.msra.mxu0 %v270
    %899 = vmatpush.msra.mxu0 %v238
    %900 = vmatpush.msra.mxu0 %v206
    %901 = vmatpush.msra.mxu0 %v174
    %902 = vmatpush.msra.mxu0 %v142
    %903 = vmatpush.msra.mxu0 %v110
    %904 = vmatmul.f32.gmra.mxu0 %v95
    %v905 = vpop.f32.mrf.mxu0
    %v906 = vadd.f32 0.0, %v905
    %907 = vdwg.mxu0
    %908 = vmatpush.msra.mxu0 %v591
    %909 = vmatpush.msra.mxu0 %v559
    %910 = vmatpush.msra.mxu0 %v527
    %911 = vmatpush.msra.mxu0 %v495
    %912 = vmatpush.msra.mxu0 %v463
    %913 = vmatpush.msra.mxu0 %v431
    %914 = vmatpush.msra.mxu0 %v399
    %915 = vmatpush.msra.mxu0 %v367
    %916 = vmatpush.msra.mxu0 %v335
    %917 = vmatpush.msra.mxu0 %v303
    %918 = vmatpush.msra.mxu0 %v271
    %919 = vmatpush.msra.mxu0 %v239
    %920 = vmatpush.msra.mxu0 %v207
    %921 = vmatpush.msra.mxu0 %v175
    %922 = vmatpush.msra.mxu0 %v143
    %923 = vmatpush.msra.mxu0 %v111
    %924 = vmatmul.f32.gmra.mxu0 %v95
    %v925 = vpop.f32.mrf.mxu0
    %v926 = vadd.f32 0.0, %v925
    %927 = vdwg.mxu0
    %928 = vmatpush.msra.mxu0 %v592
    %929 = vmatpush.msra.mxu0 %v560
    %930 = vmatpush.msra.mxu0 %v528
    %931 = vmatpush.msra.mxu0 %v496
    %932 = vmatpush.msra.mxu0 %v464
    %933 = vmatpush.msra.mxu0 %v432
    %934 = vmatpush.msra.mxu0 %v400
    %935 = vmatpush.msra.mxu0 %v368
    %936 = vmatpush.msra.mxu0 %v336
    %937 = vmatpush.msra.mxu0 %v304
    %938 = vmatpush.msra.mxu0 %v272
    %939 = vmatpush.msra.mxu0 %v240
    %940 = vmatpush.msra.mxu0 %v208
    %941 = vmatpush.msra.mxu0 %v176
    %942 = vmatpush.msra.mxu0 %v144
    %943 = vmatpush.msra.mxu0 %v112
    %944 = vmatmul.f32.gmra.mxu0 %v95
    %v945 = vpop.f32.mrf.mxu0
    %v946 = vadd.f32 0.0, %v945
    %947 = vdwg.mxu0
    %948 = vmatpush.msra.mxu0 %v593
    %949 = vmatpush.msra.mxu0 %v561
    %950 = vmatpush.msra.mxu0 %v529
    %951 = vmatpush.msra.mxu0 %v497
    %952 = vmatpush.msra.mxu0 %v465
    %953 = vmatpush.msra.mxu0 %v433
    %954 = vmatpush.msra.mxu0 %v401
    %955 = vmatpush.msra.mxu0 %v369
    %956 = vmatpush.msra.mxu0 %v337
    %957 = vmatpush.msra.mxu0 %v305
    %958 = vmatpush.msra.mxu0 %v273
    %959 = vmatpush.msra.mxu0 %v241
    %960 = vmatpush.msra.mxu0 %v209
    %961 = vmatpush.msra.mxu0 %v177
    %962 = vmatpush.msra.mxu0 %v145
    %963 = vmatpush.msra.mxu0 %v113
    %964 = vmatmul.f32.gmra.mxu0 %v95
    %v965 = vpop.f32.mrf.mxu0
    %v966 = vadd.f32 0.0, %v965
    %967 = vdwg.mxu0
    %968 = vmatpush.msra.mxu0 %v594
    %969 = vmatpush.msra.mxu0 %v562
    %970 = vmatpush.msra.mxu0 %v530
    %971 = vmatpush.msra.mxu0 %v498
    %972 = vmatpush.msra.mxu0 %v466
    %973 = vmatpush.msra.mxu0 %v434
    %974 = vmatpush.msra.mxu0 %v402
    %975 = vmatpush.msra.mxu0 %v370
    %976 = vmatpush.msra.mxu0 %v338
    %977 = vmatpush.msra.mxu0 %v306
    %978 = vmatpush.msra.mxu0 %v274
    %979 = vmatpush.msra.mxu0 %v242
    %980 = vmatpush.msra.mxu0 %v210
    %981 = vmatpush.msra.mxu0 %v178
    %982 = vmatpush.msra.mxu0 %v146
    %983 = vmatpush.msra.mxu0 %v114
    %984 = vmatmul.f32.gmra.mxu0 %v95
    %v985 = vpop.f32.mrf.mxu0
    %v986 = vadd.f32 0.0, %v985
    %987 = vdwg.mxu0
    %988 = vmatpush.msra.mxu0 %v595
    %989 = vmatpush.msra.mxu0 %v563
    %990 = vmatpush.msra.mxu0 %v531
    %991 = vmatpush.msra.mxu0 %v499
    %992 = vmatpush.msra.mxu0 %v467
    %993 = vmatpush.msra.mxu0 %v435
    %994 = vmatpush.msra.mxu0 %v403
    %995 = vmatpush.msra.mxu0 %v371
    %996 = vmatpush.msra.mxu0 %v339
    %997 = vmatpush.msra.mxu0 %v307
    %998 = vmatpush.msra.mxu0 %v275
    %999 = vmatpush.msra.mxu0 %v243
    %1000 = vmatpush.msra.mxu0 %v211
    %1001 = vmatpush.msra.mxu0 %v179
    %1002 = vmatpush.msra.mxu0 %v147
    %1003 = vmatpush.msra.mxu0 %v115
    %1004 = vmatmul.f32.gmra.mxu0 %v95
    %v1005 = vpop.f32.mrf.mxu0
    %v1006 = vadd.f32 0.0, %v1005
    %1007 = vdwg.mxu0
    %1008 = vmatpush.msra.mxu0 %v596
    %1009 = vmatpush.msra.mxu0 %v564
    %1010 = vmatpush.msra.mxu0 %v532
    %1011 = vmatpush.msra.mxu0 %v500
    %1012 = vmatpush.msra.mxu0 %v468
    %1013 = vmatpush.msra.mxu0 %v436
    %1014 = vmatpush.msra.mxu0 %v404
    %1015 = vmatpush.msra.mxu0 %v372
    %1016 = vmatpush.msra.mxu0 %v340
    %1017 = vmatpush.msra.mxu0 %v308
    %1018 = vmatpush.msra.mxu0 %v276
    %1019 = vmatpush.msra.mxu0 %v244
    %1020 = vmatpush.msra.mxu0 %v212
    %1021 = vmatpush.msra.mxu0 %v180
    %1022 = vmatpush.msra.mxu0 %v148
    %1023 = vmatpush.msra.mxu0 %v116
    %1024 = vmatmul.f32.gmra.mxu0 %v95
    %v1025 = vpop.f32.mrf.mxu0
    %v1026 = vadd.f32 0.0, %v1025
    %1027 = vdwg.mxu0
    %1028 = vmatpush.msra.mxu0 %v597
    %1029 = vmatpush.msra.mxu0 %v565
    %1030 = vmatpush.msra.mxu0 %v533
    %1031 = vmatpush.msra.mxu0 %v501
    %1032 = vmatpush.msra.mxu0 %v469
    %1033 = vmatpush.msra.mxu0 %v437
    %1034 = vmatpush.msra.mxu0 %v405
    %1035 = vmatpush.msra.mxu0 %v373
    %1036 = vmatpush.msra.mxu0 %v341
    %1037 = vmatpush.msra.mxu0 %v309
    %1038 = vmatpush.msra.mxu0 %v277
    %1039 = vmatpush.msra.mxu0 %v245
    %1040 = vmatpush.msra.mxu0 %v213
    %1041 = vmatpush.msra.mxu0 %v181
    %1042 = vmatpush.msra.mxu0 %v149
    %1043 = vmatpush.msra.mxu0 %v117
    %1044 = vmatmul.f32.gmra.mxu0 %v95
    %v1045 = vpop.f32.mrf.mxu0
    %v1046 = vadd.f32 0.0, %v1045
    %1047 = vdwg.mxu0
    %1048 = vmatpush.msra.mxu0 %v598
    %1049 = vmatpush.msra.mxu0 %v566
    %1050 = vmatpush.msra.mxu0 %v534
    %1051 = vmatpush.msra.mxu0 %v502
    %1052 = vmatpush.msra.mxu0 %v470
    %1053 = vmatpush.msra.mxu0 %v438
    %1054 = vmatpush.msra.mxu0 %v406
    %1055 = vmatpush.msra.mxu0 %v374
    %1056 = vmatpush.msra.mxu0 %v342
    %1057 = vmatpush.msra.mxu0 %v310
    %1058 = vmatpush.msra.mxu0 %v278
    %1059 = vmatpush.msra.mxu0 %v246
    %1060 = vmatpush.msra.mxu0 %v214
    %1061 = vmatpush.msra.mxu0 %v182
    %1062 = vmatpush.msra.mxu0 %v150
    %1063 = vmatpush.msra.mxu0 %v118
    %1064 = vmatmul.f32.gmra.mxu0 %v95
    %v1065 = vpop.f32.mrf.mxu0
    %v1066 = vadd.f32 0.0, %v1065
    %1067 = vdwg.mxu0
    %1068 = vmatpush.msra.mxu0 %v599
    %1069 = vmatpush.msra.mxu0 %v567
    %1070 = vmatpush.msra.mxu0 %v535
    %1071 = vmatpush.msra.mxu0 %v503
    %1072 = vmatpush.msra.mxu0 %v471
    %1073 = vmatpush.msra.mxu0 %v439
    %1074 = vmatpush.msra.mxu0 %v407
    %1075 = vmatpush.msra.mxu0 %v375
    %1076 = vmatpush.msra.mxu0 %v343
    %1077 = vmatpush.msra.mxu0 %v311
    %1078 = vmatpush.msra.mxu0 %v279
    %1079 = vmatpush.msra.mxu0 %v247
    %1080 = vmatpush.msra.mxu0 %v215
    %1081 = vmatpush.msra.mxu0 %v183
    %1082 = vmatpush.msra.mxu0 %v151
    %1083 = vmatpush.msra.mxu0 %v119
    %1084 = vmatmul.f32.gmra.mxu0 %v95
    %v1085 = vpop.f32.mrf.mxu0
    %v1086 = vadd.f32 0.0, %v1085
    %1087 = vdwg.mxu0
    %1088 = vmatpush.msra.mxu0 %v600
    %1089 = vmatpush.msra.mxu0 %v568
    %1090 = vmatpush.msra.mxu0 %v536
    %1091 = vmatpush.msra.mxu0 %v504
    %1092 = vmatpush.msra.mxu0 %v472
    %1093 = vmatpush.msra.mxu0 %v440
    %1094 = vmatpush.msra.mxu0 %v408
    %1095 = vmatpush.msra.mxu0 %v376
    %1096 = vmatpush.msra.mxu0 %v344
    %1097 = vmatpush.msra.mxu0 %v312
    %1098 = vmatpush.msra.mxu0 %v280
    %1099 = vmatpush.msra.mxu0 %v248
    %1100 = vmatpush.msra.mxu0 %v216
    %1101 = vmatpush.msra.mxu0 %v184
    %1102 = vmatpush.msra.mxu0 %v152
    %1103 = vmatpush.msra.mxu0 %v120
    %1104 = vmatmul.f32.gmra.mxu0 %v95
    %v1105 = vpop.f32.mrf.mxu0
    %v1106 = vadd.f32 0.0, %v1105
    %1107 = vdwg.mxu0
    %1108 = vmatpush.msra.mxu0 %v601
    %1109 = vmatpush.msra.mxu0 %v569
    %1110 = vmatpush.msra.mxu0 %v537
    %1111 = vmatpush.msra.mxu0 %v505
    %1112 = vmatpush.msra.mxu0 %v473
    %1113 = vmatpush.msra.mxu0 %v441
    %1114 = vmatpush.msra.mxu0 %v409
    %1115 = vmatpush.msra.mxu0 %v377
    %1116 = vmatpush.msra.mxu0 %v345
    %1117 = vmatpush.msra.mxu0 %v313
    %1118 = vmatpush.msra.mxu0 %v281
    %1119 = vmatpush.msra.mxu0 %v249
    %1120 = vmatpush.msra.mxu0 %v217
    %1121 = vmatpush.msra.mxu0 %v185
    %1122 = vmatpush.msra.mxu0 %v153
    %1123 = vmatpush.msra.mxu0 %v121
    %1124 = vmatmul.f32.gmra.mxu0 %v95
    %v1125 = vpop.f32.mrf.mxu0
    %v1126 = vadd.f32 0.0, %v1125
    %1127 = vdwg.mxu0
    %1128 = vmatpush.msra.mxu0 %v602
    %1129 = vmatpush.msra.mxu0 %v570
    %1130 = vmatpush.msra.mxu0 %v538
    %1131 = vmatpush.msra.mxu0 %v506
    %1132 = vmatpush.msra.mxu0 %v474
    %1133 = vmatpush.msra.mxu0 %v442
    %1134 = vmatpush.msra.mxu0 %v410
    %1135 = vmatpush.msra.mxu0 %v378
    %1136 = vmatpush.msra.mxu0 %v346
    %1137 = vmatpush.msra.mxu0 %v314
    %1138 = vmatpush.msra.mxu0 %v282
    %1139 = vmatpush.msra.mxu0 %v250
    %1140 = vmatpush.msra.mxu0 %v218
    %1141 = vmatpush.msra.mxu0 %v186
    %1142 = vmatpush.msra.mxu0 %v154
    %1143 = vmatpush.msra.mxu0 %v122
    %1144 = vmatmul.f32.gmra.mxu0 %v95
    %v1145 = vpop.f32.mrf.mxu0
    %v1146 = vadd.f32 0.0, %v1145
    %1147 = vdwg.mxu0
    %1148 = vmatpush.msra.mxu0 %v603
    %1149 = vmatpush.msra.mxu0 %v571
    %1150 = vmatpush.msra.mxu0 %v539
    %1151 = vmatpush.msra.mxu0 %v507
    %1152 = vmatpush.msra.mxu0 %v475
    %1153 = vmatpush.msra.mxu0 %v443
    %1154 = vmatpush.msra.mxu0 %v411
    %1155 = vmatpush.msra.mxu0 %v379
    %1156 = vmatpush.msra.mxu0 %v347
    %1157 = vmatpush.msra.mxu0 %v315
    %1158 = vmatpush.msra.mxu0 %v283
    %1159 = vmatpush.msra.mxu0 %v251
    %1160 = vmatpush.msra.mxu0 %v219
    %1161 = vmatpush.msra.mxu0 %v187
    %1162 = vmatpush.msra.mxu0 %v155
    %1163 = vmatpush.msra.mxu0 %v123
    %1164 = vmatmul.f32.gmra.mxu0 %v95
    %v1165 = vpop.f32.mrf.mxu0
    %v1166 = vadd.f32 0.0, %v1165
    %1167 = vdwg.mxu0
    %1168 = vmatpush.msra.mxu0 %v604
    %1169 = vmatpush.msra.mxu0 %v572
    %1170 = vmatpush.msra.mxu0 %v540
    %1171 = vmatpush.msra.mxu0 %v508
    %1172 = vmatpush.msra.mxu0 %v476
    %1173 = vmatpush.msra.mxu0 %v444
    %1174 = vmatpush.msra.mxu0 %v412
    %1175 = vmatpush.msra.mxu0 %v380
    %1176 = vmatpush.msra.mxu0 %v348
    %1177 = vmatpush.msra.mxu0 %v316
    %1178 = vmatpush.msra.mxu0 %v284
    %1179 = vmatpush.msra.mxu0 %v252
    %1180 = vmatpush.msra.mxu0 %v220
    %1181 = vmatpush.msra.mxu0 %v188
    %1182 = vmatpush.msra.mxu0 %v156
    %1183 = vmatpush.msra.mxu0 %v124
    %1184 = vmatmul.f32.gmra.mxu0 %v95
    %v1185 = vpop.f32.mrf.mxu0
    %v1186 = vadd.f32 0.0, %v1185
    %1187 = vdwg.mxu0
    %1188 = vmatpush.msra.mxu0 %v605
    %1189 = vmatpush.msra.mxu0 %v573
    %1190 = vmatpush.msra.mxu0 %v541
    %1191 = vmatpush.msra.mxu0 %v509
    %1192 = vmatpush.msra.mxu0 %v477
    %1193 = vmatpush.msra.mxu0 %v445
    %1194 = vmatpush.msra.mxu0 %v413
    %1195 = vmatpush.msra.mxu0 %v381
    %1196 = vmatpush.msra.mxu0 %v349
    %1197 = vmatpush.msra.mxu0 %v317
    %1198 = vmatpush.msra.mxu0 %v285
    %1199 = vmatpush.msra.mxu0 %v253
    %1200 = vmatpush.msra.mxu0 %v221
    %1201 = vmatpush.msra.mxu0 %v189
    %1202 = vmatpush.msra.mxu0 %v157
    %1203 = vmatpush.msra.mxu0 %v125
    %1204 = vmatmul.f32.gmra.mxu0 %v95
    %v1205 = vpop.f32.mrf.mxu0
    %v1206 = vadd.f32 0.0, %v1205
    %1207 = vdwg.mxu0
    %1208 = vmatpush.msra.mxu0 %v606
    %1209 = vmatpush.msra.mxu0 %v574
    %1210 = vmatpush.msra.mxu0 %v542
    %1211 = vmatpush.msra.mxu0 %v510
    %1212 = vmatpush.msra.mxu0 %v478
    %1213 = vmatpush.msra.mxu0 %v446
    %1214 = vmatpush.msra.mxu0 %v414
    %1215 = vmatpush.msra.mxu0 %v382
    %1216 = vmatpush.msra.mxu0 %v350
    %1217 = vmatpush.msra.mxu0 %v318
    %1218 = vmatpush.msra.mxu0 %v286
    %1219 = vmatpush.msra.mxu0 %v254
    %1220 = vmatpush.msra.mxu0 %v222
    %1221 = vmatpush.msra.mxu0 %v190
    %1222 = vmatpush.msra.mxu0 %v158
    %1223 = vmatpush.msra.mxu0 %v126
    %1224 = vmatmul.f32.gmra.mxu0 %v95
    %v1225 = vpop.f32.mrf.mxu0
    %v1226 = vadd.f32 0.0, %v1225
    %1227 = vdwg.mxu0
    %1228 = vmatpush.msra.mxu0 %v607
    %1229 = vmatpush.msra.mxu0 %v575
    %1230 = vmatpush.msra.mxu0 %v543
    %1231 = vmatpush.msra.mxu0 %v511
    %1232 = vmatpush.msra.mxu0 %v479
    %1233 = vmatpush.msra.mxu0 %v447
    %1234 = vmatpush.msra.mxu0 %v415
    %1235 = vmatpush.msra.mxu0 %v383
    %1236 = vmatpush.msra.mxu0 %v351
    %1237 = vmatpush.msra.mxu0 %v319
    %1238 = vmatpush.msra.mxu0 %v287
    %1239 = vmatpush.msra.mxu0 %v255
    %1240 = vmatpush.msra.mxu0 %v223
    %1241 = vmatpush.msra.mxu0 %v191
    %1242 = vmatpush.msra.mxu0 %v159
    %1243 = vmatpush.msra.mxu0 %v127
    %1244 = vmatmul.f32.gmra.mxu0 %v95
    %v1245 = vpop.f32.mrf.mxu0
    %v1246 = vadd.f32 0.0, %v1245
    %1247 = vdwg.mxu0
    %v1248 = vmul.f32 %v626, %v946
    %v1249 = vmul.f32 %v646, %v966
    %v1250 = vmul.f32 %v666, %v986
    %v1251 = vmul.f32 %v686, %v1006
    %v1252 = vmul.f32 %v706, %v1026
    %v1253 = vmul.f32 %v726, %v1046
    %v1254 = vmul.f32 %v746, %v1066
    %v1255 = vmul.f32 %v766, %v1086
    %v1256 = vmul.f32 %v786, %v1106
    %v1257 = vmul.f32 %v806, %v1126
    %v1258 = vmul.f32 %v826, %v1146
    %v1259 = vmul.f32 %v846, %v1166
    %v1260 = vmul.f32 %v866, %v1186
    %v1261 = vmul.f32 %v886, %v1206
    %v1262 = vmul.f32 %v906, %v1226
    %v1263 = vmul.f32 %v926, %v1246
    %v1264 = vld [vmem:[#allocation7] sm:$0xff]
    %v1265 = vld [vmem:[#allocation7 + $0x8] sm:$0xff]
    %v1266 = vld [vmem:[#allocation7 + $0x10] sm:$0xff]
    %v1267 = vld [vmem:[#allocation7 + $0x18] sm:$0xff]
    %v1268 = vld [vmem:[#allocation7 + $0x20] sm:$0xff]
    %v1269 = vld [vmem:[#allocation7 + $0x28] sm:$0xff]
    %v1270 = vld [vmem:[#allocation7 + $0x30] sm:$0xff]
    %v1271 = vld [vmem:[#allocation7 + $0x38] sm:$0xff]
    %v1272 = vld [vmem:[#allocation7 + $0x40] sm:$0xff]
    %v1273 = vld [vmem:[#allocation7 + $0x48] sm:$0xff]
    %v1274 = vld [vmem:[#allocation7 + $0x50] sm:$0xff]
    %v1275 = vld [vmem:[#allocation7 + $0x58] sm:$0xff]
    %v1276 = vld [vmem:[#allocation7 + $0x60] sm:$0xff]
    %v1277 = vld [vmem:[#allocation7 + $0x68] sm:$0xff]
    %v1278 = vld [vmem:[#allocation7 + $0x70] sm:$0xff]
    %v1279 = vld [vmem:[#allocation7 + $0x78] sm:$0xff]
    %v1280 = vld [vmem:[#allocation7 + $0x80] sm:$0xff]
    %v1281 = vld [vmem:[#allocation7 + $0x88] sm:$0xff]
    %v1282 = vld [vmem:[#allocation7 + $0x90] sm:$0xff]
    %v1283 = vld [vmem:[#allocation7 + $0x98] sm:$0xff]
    %v1284 = vld [vmem:[#allocation7 + $0xa0] sm:$0xff]
    %v1285 = vld [vmem:[#allocation7 + $0xa8] sm:$0xff]
    %v1286 = vld [vmem:[#allocation7 + $0xb0] sm:$0xff]
    %v1287 = vld [vmem:[#allocation7 + $0xb8] sm:$0xff]
    %v1288 = vld [vmem:[#allocation7 + $0xc0] sm:$0xff]
    %v1289 = vld [vmem:[#allocation7 + $0xc8] sm:$0xff]
    %v1290 = vld [vmem:[#allocation7 + $0xd0] sm:$0xff]
    %v1291 = vld [vmem:[#allocation7 + $0xd8] sm:$0xff]
    %v1292 = vld [vmem:[#allocation7 + $0xe0] sm:$0xff]
    %v1293 = vld [vmem:[#allocation7 + $0xe8] sm:$0xff]
    %v1294 = vld [vmem:[#allocation7 + $0xf0] sm:$0xff]
    %v1295 = vld [vmem:[#allocation7 + $0xf8] sm:$0xff]
    %v1296 = vld [vmem:[#allocation7 + $0x100] sm:$0xff]
    %v1297 = vld [vmem:[#allocation7 + $0x108] sm:$0xff]
    %v1298 = vld [vmem:[#allocation7 + $0x110] sm:$0xff]
    %v1299 = vld [vmem:[#allocation7 + $0x118] sm:$0xff]
    %v1300 = vld [vmem:[#allocation7 + $0x120] sm:$0xff]
    %v1301 = vld [vmem:[#allocation7 + $0x128] sm:$0xff]
    %v1302 = vld [vmem:[#allocation7 + $0x130] sm:$0xff]
    %v1303 = vld [vmem:[#allocation7 + $0x138] sm:$0xff]
    %v1304 = vld [vmem:[#allocation7 + $0x140] sm:$0xff]
    %v1305 = vld [vmem:[#allocation7 + $0x148] sm:$0xff]
    %v1306 = vld [vmem:[#allocation7 + $0x150] sm:$0xff]
    %v1307 = vld [vmem:[#allocation7 + $0x158] sm:$0xff]
    %v1308 = vld [vmem:[#allocation7 + $0x160] sm:$0xff]
    %v1309 = vld [vmem:[#allocation7 + $0x168] sm:$0xff]
    %v1310 = vld [vmem:[#allocation7 + $0x170] sm:$0xff]
    %v1311 = vld [vmem:[#allocation7 + $0x178] sm:$0xff]
    %v1312 = vld [vmem:[#allocation7 + $0x180] sm:$0xff]
    %v1313 = vld [vmem:[#allocation7 + $0x188] sm:$0xff]
    %v1314 = vld [vmem:[#allocation7 + $0x190] sm:$0xff]
    %v1315 = vld [vmem:[#allocation7 + $0x198] sm:$0xff]
    %v1316 = vld [vmem:[#allocation7 + $0x1a0] sm:$0xff]
    %v1317 = vld [vmem:[#allocation7 + $0x1a8] sm:$0xff]
    %v1318 = vld [vmem:[#allocation7 + $0x1b0] sm:$0xff]
    %v1319 = vld [vmem:[#allocation7 + $0x1b8] sm:$0xff]
    %v1320 = vld [vmem:[#allocation7 + $0x1c0] sm:$0xff]
    %v1321 = vld [vmem:[#allocation7 + $0x1c8] sm:$0xff]
    %v1322 = vld [vmem:[#allocation7 + $0x1d0] sm:$0xff]
    %v1323 = vld [vmem:[#allocation7 + $0x1d8] sm:$0xff]
    %v1324 = vld [vmem:[#allocation7 + $0x1e0] sm:$0xff]
    %v1325 = vld [vmem:[#allocation7 + $0x1e8] sm:$0xff]
    %v1326 = vld [vmem:[#allocation7 + $0x1f0] sm:$0xff]
    %v1327 = vld [vmem:[#allocation7 + $0x1f8] sm:$0xff]
    %v1328 = vld [vmem:[#allocation7 + $0x200] sm:$0xff]
    %v1329 = vld [vmem:[#allocation7 + $0x208] sm:$0xff]
    %v1330 = vld [vmem:[#allocation7 + $0x210] sm:$0xff]
    %v1331 = vld [vmem:[#allocation7 + $0x218] sm:$0xff]
    %v1332 = vld [vmem:[#allocation7 + $0x220] sm:$0xff]
    %v1333 = vld [vmem:[#allocation7 + $0x228] sm:$0xff]
    %v1334 = vld [vmem:[#allocation7 + $0x230] sm:$0xff]
    %v1335 = vld [vmem:[#allocation7 + $0x238] sm:$0xff]
    %v1336 = vld [vmem:[#allocation7 + $0x240] sm:$0xff]
    %v1337 = vld [vmem:[#allocation7 + $0x248] sm:$0xff]
    %v1338 = vld [vmem:[#allocation7 + $0x250] sm:$0xff]
    %v1339 = vld [vmem:[#allocation7 + $0x258] sm:$0xff]
    %v1340 = vld [vmem:[#allocation7 + $0x260] sm:$0xff]
    %v1341 = vld [vmem:[#allocation7 + $0x268] sm:$0xff]
    %v1342 = vld [vmem:[#allocation7 + $0x270] sm:$0xff]
    %v1343 = vld [vmem:[#allocation7 + $0x278] sm:$0xff]
    %v1344 = vld [vmem:[#allocation7 + $0x280] sm:$0xff]
    %v1345 = vld [vmem:[#allocation7 + $0x288] sm:$0xff]
    %v1346 = vld [vmem:[#allocation7 + $0x290] sm:$0xff]
    %v1347 = vld [vmem:[#allocation7 + $0x298] sm:$0xff]
    %v1348 = vld [vmem:[#allocation7 + $0x2a0] sm:$0xff]
    %v1349 = vld [vmem:[#allocation7 + $0x2a8] sm:$0xff]
    %v1350 = vld [vmem:[#allocation7 + $0x2b0] sm:$0xff]
    %v1351 = vld [vmem:[#allocation7 + $0x2b8] sm:$0xff]
    %v1352 = vld [vmem:[#allocation7 + $0x2c0] sm:$0xff]
    %v1353 = vld [vmem:[#allocation7 + $0x2c8] sm:$0xff]
    %v1354 = vld [vmem:[#allocation7 + $0x2d0] sm:$0xff]
    %v1355 = vld [vmem:[#allocation7 + $0x2d8] sm:$0xff]
    %v1356 = vld [vmem:[#allocation7 + $0x2e0] sm:$0xff]
    %v1357 = vld [vmem:[#allocation7 + $0x2e8] sm:$0xff]
    %v1358 = vld [vmem:[#allocation7 + $0x2f0] sm:$0xff]
    %v1359 = vld [vmem:[#allocation7 + $0x2f8] sm:$0xff]
    %v1360 = vld [vmem:[#allocation7 + $0x300] sm:$0xff]
    %v1361 = vld [vmem:[#allocation7 + $0x308] sm:$0xff]
    %v1362 = vld [vmem:[#allocation7 + $0x310] sm:$0xff]
    %v1363 = vld [vmem:[#allocation7 + $0x318] sm:$0xff]
    %v1364 = vld [vmem:[#allocation7 + $0x320] sm:$0xff]
    %v1365 = vld [vmem:[#allocation7 + $0x328] sm:$0xff]
    %v1366 = vld [vmem:[#allocation7 + $0x330] sm:$0xff]
    %v1367 = vld [vmem:[#allocation7 + $0x338] sm:$0xff]
    %v1368 = vld [vmem:[#allocation7 + $0x340] sm:$0xff]
    %v1369 = vld [vmem:[#allocation7 + $0x348] sm:$0xff]
    %v1370 = vld [vmem:[#allocation7 + $0x350] sm:$0xff]
    %v1371 = vld [vmem:[#allocation7 + $0x358] sm:$0xff]
    %v1372 = vld [vmem:[#allocation7 + $0x360] sm:$0xff]
    %v1373 = vld [vmem:[#allocation7 + $0x368] sm:$0xff]
    %v1374 = vld [vmem:[#allocation7 + $0x370] sm:$0xff]
    %v1375 = vld [vmem:[#allocation7 + $0x378] sm:$0xff]
    %v1376 = vld [vmem:[#allocation7 + $0x380] sm:$0xff]
    %v1377 = vld [vmem:[#allocation7 + $0x388] sm:$0xff]
    %v1378 = vld [vmem:[#allocation7 + $0x390] sm:$0xff]
    %v1379 = vld [vmem:[#allocation7 + $0x398] sm:$0xff]
    %v1380 = vld [vmem:[#allocation7 + $0x3a0] sm:$0xff]
    %v1381 = vld [vmem:[#allocation7 + $0x3a8] sm:$0xff]
    %v1382 = vld [vmem:[#allocation7 + $0x3b0] sm:$0xff]
    %v1383 = vld [vmem:[#allocation7 + $0x3b8] sm:$0xff]
    %v1384 = vld [vmem:[#allocation7 + $0x3c0] sm:$0xff]
    %v1385 = vld [vmem:[#allocation7 + $0x3c8] sm:$0xff]
    %v1386 = vld [vmem:[#allocation7 + $0x3d0] sm:$0xff]
    %v1387 = vld [vmem:[#allocation7 + $0x3d8] sm:$0xff]
    %v1388 = vld [vmem:[#allocation7 + $0x3e0] sm:$0xff]
    %v1389 = vld [vmem:[#allocation7 + $0x3e8] sm:$0xff]
    %v1390 = vld [vmem:[#allocation7 + $0x3f0] sm:$0xff]
    %v1391 = vld [vmem:[#allocation7 + $0x3f8] sm:$0xff]
    %v1392 = vld [vmem:[#allocation7 + $0x400] sm:$0xff]
    %v1393 = vld [vmem:[#allocation7 + $0x408] sm:$0xff]
    %v1394 = vld [vmem:[#allocation7 + $0x410] sm:$0xff]
    %v1395 = vld [vmem:[#allocation7 + $0x418] sm:$0xff]
    %v1396 = vld [vmem:[#allocation7 + $0x420] sm:$0xff]
    %v1397 = vld [vmem:[#allocation7 + $0x428] sm:$0xff]
    %v1398 = vld [vmem:[#allocation7 + $0x430] sm:$0xff]
    %v1399 = vld [vmem:[#allocation7 + $0x438] sm:$0xff]
    %v1400 = vld [vmem:[#allocation7 + $0x440] sm:$0xff]
    %v1401 = vld [vmem:[#allocation7 + $0x448] sm:$0xff]
    %v1402 = vld [vmem:[#allocation7 + $0x450] sm:$0xff]
    %v1403 = vld [vmem:[#allocation7 + $0x458] sm:$0xff]
    %v1404 = vld [vmem:[#allocation7 + $0x460] sm:$0xff]
    %v1405 = vld [vmem:[#allocation7 + $0x468] sm:$0xff]
    %v1406 = vld [vmem:[#allocation7 + $0x470] sm:$0xff]
    %v1407 = vld [vmem:[#allocation7 + $0x478] sm:$0xff]
    %v1408 = vld [vmem:[#allocation7 + $0x480] sm:$0xff]
    %v1409 = vld [vmem:[#allocation7 + $0x488] sm:$0xff]
    %v1410 = vld [vmem:[#allocation7 + $0x490] sm:$0xff]
    %v1411 = vld [vmem:[#allocation7 + $0x498] sm:$0xff]
    %v1412 = vld [vmem:[#allocation7 + $0x4a0] sm:$0xff]
    %v1413 = vld [vmem:[#allocation7 + $0x4a8] sm:$0xff]
    %v1414 = vld [vmem:[#allocation7 + $0x4b0] sm:$0xff]
    %v1415 = vld [vmem:[#allocation7 + $0x4b8] sm:$0xff]
    %v1416 = vld [vmem:[#allocation7 + $0x4c0] sm:$0xff]
    %v1417 = vld [vmem:[#allocation7 + $0x4c8] sm:$0xff]
    %v1418 = vld [vmem:[#allocation7 + $0x4d0] sm:$0xff]
    %v1419 = vld [vmem:[#allocation7 + $0x4d8] sm:$0xff]
    %v1420 = vld [vmem:[#allocation7 + $0x4e0] sm:$0xff]
    %v1421 = vld [vmem:[#allocation7 + $0x4e8] sm:$0xff]
    %v1422 = vld [vmem:[#allocation7 + $0x4f0] sm:$0xff]
    %v1423 = vld [vmem:[#allocation7 + $0x4f8] sm:$0xff]
    %v1424 = vld [vmem:[#allocation7 + $0x500] sm:$0xff]
    %v1425 = vld [vmem:[#allocation7 + $0x508] sm:$0xff]
    %v1426 = vld [vmem:[#allocation7 + $0x510] sm:$0xff]
    %v1427 = vld [vmem:[#allocation7 + $0x518] sm:$0xff]
    %v1428 = vld [vmem:[#allocation7 + $0x520] sm:$0xff]
    %v1429 = vld [vmem:[#allocation7 + $0x528] sm:$0xff]
    %v1430 = vld [vmem:[#allocation7 + $0x530] sm:$0xff]
    %v1431 = vld [vmem:[#allocation7 + $0x538] sm:$0xff]
    %v1432 = vld [vmem:[#allocation7 + $0x540] sm:$0xff]
    %v1433 = vld [vmem:[#allocation7 + $0x548] sm:$0xff]
    %v1434 = vld [vmem:[#allocation7 + $0x550] sm:$0xff]
    %v1435 = vld [vmem:[#allocation7 + $0x558] sm:$0xff]
    %v1436 = vld [vmem:[#allocation7 + $0x560] sm:$0xff]
    %v1437 = vld [vmem:[#allocation7 + $0x568] sm:$0xff]
    %v1438 = vld [vmem:[#allocation7 + $0x570] sm:$0xff]
    %v1439 = vld [vmem:[#allocation7 + $0x578] sm:$0xff]
    %v1440 = vld [vmem:[#allocation7 + $0x580] sm:$0xff]
    %v1441 = vld [vmem:[#allocation7 + $0x588] sm:$0xff]
    %v1442 = vld [vmem:[#allocation7 + $0x590] sm:$0xff]
    %v1443 = vld [vmem:[#allocation7 + $0x598] sm:$0xff]
    %v1444 = vld [vmem:[#allocation7 + $0x5a0] sm:$0xff]
    %v1445 = vld [vmem:[#allocation7 + $0x5a8] sm:$0xff]
    %v1446 = vld [vmem:[#allocation7 + $0x5b0] sm:$0xff]
    %v1447 = vld [vmem:[#allocation7 + $0x5b8] sm:$0xff]
    %v1448 = vld [vmem:[#allocation7 + $0x5c0] sm:$0xff]
    %v1449 = vld [vmem:[#allocation7 + $0x5c8] sm:$0xff]
    %v1450 = vld [vmem:[#allocation7 + $0x5d0] sm:$0xff]
    %v1451 = vld [vmem:[#allocation7 + $0x5d8] sm:$0xff]
    %v1452 = vld [vmem:[#allocation7 + $0x5e0] sm:$0xff]
    %v1453 = vld [vmem:[#allocation7 + $0x5e8] sm:$0xff]
    %v1454 = vld [vmem:[#allocation7 + $0x5f0] sm:$0xff]
    %v1455 = vld [vmem:[#allocation7 + $0x5f8] sm:$0xff]
    %v1456 = vld [vmem:[#allocation7 + $0x600] sm:$0xff]
    %v1457 = vld [vmem:[#allocation7 + $0x608] sm:$0xff]
    %v1458 = vld [vmem:[#allocation7 + $0x610] sm:$0xff]
    %v1459 = vld [vmem:[#allocation7 + $0x618] sm:$0xff]
    %v1460 = vld [vmem:[#allocation7 + $0x620] sm:$0xff]
    %v1461 = vld [vmem:[#allocation7 + $0x628] sm:$0xff]
    %v1462 = vld [vmem:[#allocation7 + $0x630] sm:$0xff]
    %v1463 = vld [vmem:[#allocation7 + $0x638] sm:$0xff]
    %v1464 = vld [vmem:[#allocation7 + $0x640] sm:$0xff]
    %v1465 = vld [vmem:[#allocation7 + $0x648] sm:$0xff]
    %v1466 = vld [vmem:[#allocation7 + $0x650] sm:$0xff]
    %v1467 = vld [vmem:[#allocation7 + $0x658] sm:$0xff]
    %v1468 = vld [vmem:[#allocation7 + $0x660] sm:$0xff]
    %v1469 = vld [vmem:[#allocation7 + $0x668] sm:$0xff]
    %v1470 = vld [vmem:[#allocation7 + $0x670] sm:$0xff]
    %v1471 = vld [vmem:[#allocation7 + $0x678] sm:$0xff]
    %v1472 = vld [vmem:[#allocation7 + $0x680] sm:$0xff]
    %v1473 = vld [vmem:[#allocation7 + $0x688] sm:$0xff]
    %v1474 = vld [vmem:[#allocation7 + $0x690] sm:$0xff]
    %v1475 = vld [vmem:[#allocation7 + $0x698] sm:$0xff]
    %v1476 = vld [vmem:[#allocation7 + $0x6a0] sm:$0xff]
    %v1477 = vld [vmem:[#allocation7 + $0x6a8] sm:$0xff]
    %v1478 = vld [vmem:[#allocation7 + $0x6b0] sm:$0xff]
    %v1479 = vld [vmem:[#allocation7 + $0x6b8] sm:$0xff]
    %v1480 = vld [vmem:[#allocation7 + $0x6c0] sm:$0xff]
    %v1481 = vld [vmem:[#allocation7 + $0x6c8] sm:$0xff]
    %v1482 = vld [vmem:[#allocation7 + $0x6d0] sm:$0xff]
    %v1483 = vld [vmem:[#allocation7 + $0x6d8] sm:$0xff]
    %v1484 = vld [vmem:[#allocation7 + $0x6e0] sm:$0xff]
    %v1485 = vld [vmem:[#allocation7 + $0x6e8] sm:$0xff]
    %v1486 = vld [vmem:[#allocation7 + $0x6f0] sm:$0xff]
    %v1487 = vld [vmem:[#allocation7 + $0x6f8] sm:$0xff]
    %v1488 = vld [vmem:[#allocation7 + $0x700] sm:$0xff]
    %v1489 = vld [vmem:[#allocation7 + $0x708] sm:$0xff]
    %v1490 = vld [vmem:[#allocation7 + $0x710] sm:$0xff]
    %v1491 = vld [vmem:[#allocation7 + $0x718] sm:$0xff]
    %v1492 = vld [vmem:[#allocation7 + $0x720] sm:$0xff]
    %v1493 = vld [vmem:[#allocation7 + $0x728] sm:$0xff]
    %v1494 = vld [vmem:[#allocation7 + $0x730] sm:$0xff]
    %v1495 = vld [vmem:[#allocation7 + $0x738] sm:$0xff]
    %v1496 = vld [vmem:[#allocation7 + $0x740] sm:$0xff]
    %v1497 = vld [vmem:[#allocation7 + $0x748] sm:$0xff]
    %v1498 = vld [vmem:[#allocation7 + $0x750] sm:$0xff]
    %v1499 = vld [vmem:[#allocation7 + $0x758] sm:$0xff]
    %v1500 = vld [vmem:[#allocation7 + $0x760] sm:$0xff]
    %v1501 = vld [vmem:[#allocation7 + $0x768] sm:$0xff]
    %v1502 = vld [vmem:[#allocation7 + $0x770] sm:$0xff]
    %v1503 = vld [vmem:[#allocation7 + $0x778] sm:$0xff]
    %v1504 = vld [vmem:[#allocation7 + $0x780] sm:$0xff]
    %v1505 = vld [vmem:[#allocation7 + $0x788] sm:$0xff]
    %v1506 = vld [vmem:[#allocation7 + $0x790] sm:$0xff]
    %v1507 = vld [vmem:[#allocation7 + $0x798] sm:$0xff]
    %v1508 = vld [vmem:[#allocation7 + $0x7a0] sm:$0xff]
    %v1509 = vld [vmem:[#allocation7 + $0x7a8] sm:$0xff]
    %v1510 = vld [vmem:[#allocation7 + $0x7b0] sm:$0xff]
    %v1511 = vld [vmem:[#allocation7 + $0x7b8] sm:$0xff]
    %v1512 = vld [vmem:[#allocation7 + $0x7c0] sm:$0xff]
    %v1513 = vld [vmem:[#allocation7 + $0x7c8] sm:$0xff]
    %v1514 = vld [vmem:[#allocation7 + $0x7d0] sm:$0xff]
    %v1515 = vld [vmem:[#allocation7 + $0x7d8] sm:$0xff]
    %v1516 = vld [vmem:[#allocation7 + $0x7e0] sm:$0xff]
    %v1517 = vld [vmem:[#allocation7 + $0x7e8] sm:$0xff]
    %v1518 = vld [vmem:[#allocation7 + $0x7f0] sm:$0xff]
    %v1519 = vld [vmem:[#allocation7 + $0x7f8] sm:$0xff]
    %v1520 = vld [vmem:[#allocation8] sm:$0xff]
    %v1521 = vld [vmem:[#allocation8 + $0x8] sm:$0xff]
    %v1522 = vld [vmem:[#allocation8 + $0x10] sm:$0xff]
    %v1523 = vld [vmem:[#allocation8 + $0x18] sm:$0xff]
    %v1524 = vld [vmem:[#allocation8 + $0x20] sm:$0xff]
    %v1525 = vld [vmem:[#allocation8 + $0x28] sm:$0xff]
    %v1526 = vld [vmem:[#allocation8 + $0x30] sm:$0xff]
    %v1527 = vld [vmem:[#allocation8 + $0x38] sm:$0xff]
    %v1528 = vld [vmem:[#allocation8 + $0x40] sm:$0xff]
    %v1529 = vld [vmem:[#allocation8 + $0x48] sm:$0xff]
    %v1530 = vld [vmem:[#allocation8 + $0x50] sm:$0xff]
    %v1531 = vld [vmem:[#allocation8 + $0x58] sm:$0xff]
    %v1532 = vld [vmem:[#allocation8 + $0x60] sm:$0xff]
    %v1533 = vld [vmem:[#allocation8 + $0x68] sm:$0xff]
    %v1534 = vld [vmem:[#allocation8 + $0x70] sm:$0xff]
    %v1535 = vld [vmem:[#allocation8 + $0x78] sm:$0xff]
    %1536 = vmatpush.msra.mxu0 %v1535
    %1537 = vmatpush.msra.mxu0 %v1534
    %1538 = vmatpush.msra.mxu0 %v1533
    %1539 = vmatpush.msra.mxu0 %v1532
    %1540 = vmatpush.msra.mxu0 %v1531
    %1541 = vmatpush.msra.mxu0 %v1530
    %1542 = vmatpush.msra.mxu0 %v1529
    %1543 = vmatpush.msra.mxu0 %v1528
    %1544 = vmatpush.msra.mxu0 %v1527
    %1545 = vmatpush.msra.mxu0 %v1526
    %1546 = vmatpush.msra.mxu0 %v1525
    %1547 = vmatpush.msra.mxu0 %v1524
    %1548 = vmatpush.msra.mxu0 %v1523
    %1549 = vmatpush.msra.mxu0 %v1522
    %1550 = vmatpush.msra.mxu0 %v1521
    %1551 = vmatpush.msra.mxu0 %v1520
    %1552 = vmatmul.f32.gmra.mxu0 %v95
    %v1553 = vpop.f32.mrf.mxu0
    %v1554 = vadd.f32 0.0, %v1553
    %1555 = vdwg.mxu0
    %1556 = vmatpush.msra.mxu0 %v1279
    %1557 = vmatpush.msra.mxu0 %v1278
    %1558 = vmatpush.msra.mxu0 %v1277
    %1559 = vmatpush.msra.mxu0 %v1276
    %1560 = vmatpush.msra.mxu0 %v1275
    %1561 = vmatpush.msra.mxu0 %v1274
    %1562 = vmatpush.msra.mxu0 %v1273
    %1563 = vmatpush.msra.mxu0 %v1272
    %1564 = vmatpush.msra.mxu0 %v1271
    %1565 = vmatpush.msra.mxu0 %v1270
    %1566 = vmatpush.msra.mxu0 %v1269
    %1567 = vmatpush.msra.mxu0 %v1268
    %1568 = vmatpush.msra.mxu0 %v1267
    %1569 = vmatpush.msra.mxu0 %v1266
    %1570 = vmatpush.msra.mxu0 %v1265
    %1571 = vmatpush.msra.mxu0 %v1264
    %1572 = vmatmul.f32.gmra.mxu0 %v1248
    %v1573 = vpop.f32.mrf.mxu0
    %v1574 = vadd.f32 %v1554, %v1573
    %1575 = vdwg.mxu0
    %1576 = vmatpush.msra.mxu0 %v1295
    %1577 = vmatpush.msra.mxu0 %v1294
    %1578 = vmatpush.msra.mxu0 %v1293
    %1579 = vmatpush.msra.mxu0 %v1292
    %1580 = vmatpush.msra.mxu0 %v1291
    %1581 = vmatpush.msra.mxu0 %v1290
    %1582 = vmatpush.msra.mxu0 %v1289
    %1583 = vmatpush.msra.mxu0 %v1288
    %1584 = vmatpush.msra.mxu0 %v1287
    %1585 = vmatpush.msra.mxu0 %v1286
    %1586 = vmatpush.msra.mxu0 %v1285
    %1587 = vmatpush.msra.mxu0 %v1284
    %1588 = vmatpush.msra.mxu0 %v1283
    %1589 = vmatpush.msra.mxu0 %v1282
    %1590 = vmatpush.msra.mxu0 %v1281
    %1591 = vmatpush.msra.mxu0 %v1280
    %1592 = vmatmul.f32.gmra.mxu0 %v1249
    %v1593 = vpop.f32.mrf.mxu0
    %v1594 = vadd.f32 %v1574, %v1593
    %1595 = vdwg.mxu0
    %1596 = vmatpush.msra.mxu0 %v1311
    %1597 = vmatpush.msra.mxu0 %v1310
    %1598 = vmatpush.msra.mxu0 %v1309
    %1599 = vmatpush.msra.mxu0 %v1308
    %1600 = vmatpush.msra.mxu0 %v1307
    %1601 = vmatpush.msra.mxu0 %v1306
    %1602 = vmatpush.msra.mxu0 %v1305
    %1603 = vmatpush.msra.mxu0 %v1304
    %1604 = vmatpush.msra.mxu0 %v1303
    %1605 = vmatpush.msra.mxu0 %v1302
    %1606 = vmatpush.msra.mxu0 %v1301
    %1607 = vmatpush.msra.mxu0 %v1300
    %1608 = vmatpush.msra.mxu0 %v1299
    %1609 = vmatpush.msra.mxu0 %v1298
    %1610 = vmatpush.msra.mxu0 %v1297
    %1611 = vmatpush.msra.mxu0 %v1296
    %1612 = vmatmul.f32.gmra.mxu0 %v1250
    %v1613 = vpop.f32.mrf.mxu0
    %v1614 = vadd.f32 %v1594, %v1613
    %1615 = vdwg.mxu0
    %1616 = vmatpush.msra.mxu0 %v1327
    %1617 = vmatpush.msra.mxu0 %v1326
    %1618 = vmatpush.msra.mxu0 %v1325
    %1619 = vmatpush.msra.mxu0 %v1324
    %1620 = vmatpush.msra.mxu0 %v1323
    %1621 = vmatpush.msra.mxu0 %v1322
    %1622 = vmatpush.msra.mxu0 %v1321
    %1623 = vmatpush.msra.mxu0 %v1320
    %1624 = vmatpush.msra.mxu0 %v1319
    %1625 = vmatpush.msra.mxu0 %v1318
    %1626 = vmatpush.msra.mxu0 %v1317
    %1627 = vmatpush.msra.mxu0 %v1316
    %1628 = vmatpush.msra.mxu0 %v1315
    %1629 = vmatpush.msra.mxu0 %v1314
    %1630 = vmatpush.msra.mxu0 %v1313
    %1631 = vmatpush.msra.mxu0 %v1312
    %1632 = vmatmul.f32.gmra.mxu0 %v1251
    %v1633 = vpop.f32.mrf.mxu0
    %v1634 = vadd.f32 %v1614, %v1633
    %1635 = vdwg.mxu0
    %1636 = vmatpush.msra.mxu0 %v1343
    %1637 = vmatpush.msra.mxu0 %v1342
    %1638 = vmatpush.msra.mxu0 %v1341
    %1639 = vmatpush.msra.mxu0 %v1340
    %1640 = vmatpush.msra.mxu0 %v1339
    %1641 = vmatpush.msra.mxu0 %v1338
    %1642 = vmatpush.msra.mxu0 %v1337
    %1643 = vmatpush.msra.mxu0 %v1336
    %1644 = vmatpush.msra.mxu0 %v1335
    %1645 = vmatpush.msra.mxu0 %v1334
    %1646 = vmatpush.msra.mxu0 %v1333
    %1647 = vmatpush.msra.mxu0 %v1332
    %1648 = vmatpush.msra.mxu0 %v1331
    %1649 = vmatpush.msra.mxu0 %v1330
    %1650 = vmatpush.msra.mxu0 %v1329
    %1651 = vmatpush.msra.mxu0 %v1328
    %1652 = vmatmul.f32.gmra.mxu0 %v1252
    %v1653 = vpop.f32.mrf.mxu0
    %v1654 = vadd.f32 %v1634, %v1653
    %1655 = vdwg.mxu0
    %1656 = vmatpush.msra.mxu0 %v1359
    %1657 = vmatpush.msra.mxu0 %v1358
    %1658 = vmatpush.msra.mxu0 %v1357
    %1659 = vmatpush.msra.mxu0 %v1356
    %1660 = vmatpush.msra.mxu0 %v1355
    %1661 = vmatpush.msra.mxu0 %v1354
    %1662 = vmatpush.msra.mxu0 %v1353
    %1663 = vmatpush.msra.mxu0 %v1352
    %1664 = vmatpush.msra.mxu0 %v1351
    %1665 = vmatpush.msra.mxu0 %v1350
    %1666 = vmatpush.msra.mxu0 %v1349
    %1667 = vmatpush.msra.mxu0 %v1348
    %1668 = vmatpush.msra.mxu0 %v1347
    %1669 = vmatpush.msra.mxu0 %v1346
    %1670 = vmatpush.msra.mxu0 %v1345
    %1671 = vmatpush.msra.mxu0 %v1344
    %1672 = vmatmul.f32.gmra.mxu0 %v1253
    %v1673 = vpop.f32.mrf.mxu0
    %v1674 = vadd.f32 %v1654, %v1673
    %1675 = vdwg.mxu0
    %1676 = vmatpush.msra.mxu0 %v1375
    %1677 = vmatpush.msra.mxu0 %v1374
    %1678 = vmatpush.msra.mxu0 %v1373
    %1679 = vmatpush.msra.mxu0 %v1372
    %1680 = vmatpush.msra.mxu0 %v1371
    %1681 = vmatpush.msra.mxu0 %v1370
    %1682 = vmatpush.msra.mxu0 %v1369
    %1683 = vmatpush.msra.mxu0 %v1368
    %1684 = vmatpush.msra.mxu0 %v1367
    %1685 = vmatpush.msra.mxu0 %v1366
    %1686 = vmatpush.msra.mxu0 %v1365
    %1687 = vmatpush.msra.mxu0 %v1364
    %1688 = vmatpush.msra.mxu0 %v1363
    %1689 = vmatpush.msra.mxu0 %v1362
    %1690 = vmatpush.msra.mxu0 %v1361
    %1691 = vmatpush.msra.mxu0 %v1360
    %1692 = vmatmul.f32.gmra.mxu0 %v1254
    %v1693 = vpop.f32.mrf.mxu0
    %v1694 = vadd.f32 %v1674, %v1693
    %1695 = vdwg.mxu0
    %1696 = vmatpush.msra.mxu0 %v1391
    %1697 = vmatpush.msra.mxu0 %v1390
    %1698 = vmatpush.msra.mxu0 %v1389
    %1699 = vmatpush.msra.mxu0 %v1388
    %1700 = vmatpush.msra.mxu0 %v1387
    %1701 = vmatpush.msra.mxu0 %v1386
    %1702 = vmatpush.msra.mxu0 %v1385
    %1703 = vmatpush.msra.mxu0 %v1384
    %1704 = vmatpush.msra.mxu0 %v1383
    %1705 = vmatpush.msra.mxu0 %v1382
    %1706 = vmatpush.msra.mxu0 %v1381
    %1707 = vmatpush.msra.mxu0 %v1380
    %1708 = vmatpush.msra.mxu0 %v1379
    %1709 = vmatpush.msra.mxu0 %v1378
    %1710 = vmatpush.msra.mxu0 %v1377
    %1711 = vmatpush.msra.mxu0 %v1376
    %1712 = vmatmul.f32.gmra.mxu0 %v1255
    %v1713 = vpop.f32.mrf.mxu0
    %v1714 = vadd.f32 %v1694, %v1713
    %1715 = vdwg.mxu0
    %1716 = vmatpush.msra.mxu0 %v1407
    %1717 = vmatpush.msra.mxu0 %v1406
    %1718 = vmatpush.msra.mxu0 %v1405
    %1719 = vmatpush.msra.mxu0 %v1404
    %1720 = vmatpush.msra.mxu0 %v1403
    %1721 = vmatpush.msra.mxu0 %v1402
    %1722 = vmatpush.msra.mxu0 %v1401
    %1723 = vmatpush.msra.mxu0 %v1400
    %1724 = vmatpush.msra.mxu0 %v1399
    %1725 = vmatpush.msra.mxu0 %v1398
    %1726 = vmatpush.msra.mxu0 %v1397
    %1727 = vmatpush.msra.mxu0 %v1396
    %1728 = vmatpush.msra.mxu0 %v1395
    %1729 = vmatpush.msra.mxu0 %v1394
    %1730 = vmatpush.msra.mxu0 %v1393
    %1731 = vmatpush.msra.mxu0 %v1392
    %1732 = vmatmul.f32.gmra.mxu0 %v1256
    %v1733 = vpop.f32.mrf.mxu0
    %v1734 = vadd.f32 %v1714, %v1733
    %1735 = vdwg.mxu0
    %1736 = vmatpush.msra.mxu0 %v1423
    %1737 = vmatpush.msra.mxu0 %v1422
    %1738 = vmatpush.msra.mxu0 %v1421
    %1739 = vmatpush.msra.mxu0 %v1420
    %1740 = vmatpush.msra.mxu0 %v1419
    %1741 = vmatpush.msra.mxu0 %v1418
    %1742 = vmatpush.msra.mxu0 %v1417
    %1743 = vmatpush.msra.mxu0 %v1416
    %1744 = vmatpush.msra.mxu0 %v1415
    %1745 = vmatpush.msra.mxu0 %v1414
    %1746 = vmatpush.msra.mxu0 %v1413
    %1747 = vmatpush.msra.mxu0 %v1412
    %1748 = vmatpush.msra.mxu0 %v1411
    %1749 = vmatpush.msra.mxu0 %v1410
    %1750 = vmatpush.msra.mxu0 %v1409
    %1751 = vmatpush.msra.mxu0 %v1408
    %1752 = vmatmul.f32.gmra.mxu0 %v1257
    %v1753 = vpop.f32.mrf.mxu0
    %v1754 = vadd.f32 %v1734, %v1753
    %1755 = vdwg.mxu0
    %1756 = vmatpush.msra.mxu0 %v1439
    %1757 = vmatpush.msra.mxu0 %v1438
    %1758 = vmatpush.msra.mxu0 %v1437
    %1759 = vmatpush.msra.mxu0 %v1436
    %1760 = vmatpush.msra.mxu0 %v1435
    %1761 = vmatpush.msra.mxu0 %v1434
    %1762 = vmatpush.msra.mxu0 %v1433
    %1763 = vmatpush.msra.mxu0 %v1432
    %1764 = vmatpush.msra.mxu0 %v1431
    %1765 = vmatpush.msra.mxu0 %v1430
    %1766 = vmatpush.msra.mxu0 %v1429
    %1767 = vmatpush.msra.mxu0 %v1428
    %1768 = vmatpush.msra.mxu0 %v1427
    %1769 = vmatpush.msra.mxu0 %v1426
    %1770 = vmatpush.msra.mxu0 %v1425
    %1771 = vmatpush.msra.mxu0 %v1424
    %1772 = vmatmul.f32.gmra.mxu0 %v1258
    %v1773 = vpop.f32.mrf.mxu0
    %v1774 = vadd.f32 %v1754, %v1773
    %1775 = vdwg.mxu0
    %1776 = vmatpush.msra.mxu0 %v1455
    %1777 = vmatpush.msra.mxu0 %v1454
    %1778 = vmatpush.msra.mxu0 %v1453
    %1779 = vmatpush.msra.mxu0 %v1452
    %1780 = vmatpush.msra.mxu0 %v1451
    %1781 = vmatpush.msra.mxu0 %v1450
    %1782 = vmatpush.msra.mxu0 %v1449
    %1783 = vmatpush.msra.mxu0 %v1448
    %1784 = vmatpush.msra.mxu0 %v1447
    %1785 = vmatpush.msra.mxu0 %v1446
    %1786 = vmatpush.msra.mxu0 %v1445
    %1787 = vmatpush.msra.mxu0 %v1444
    %1788 = vmatpush.msra.mxu0 %v1443
    %1789 = vmatpush.msra.mxu0 %v1442
    %1790 = vmatpush.msra.mxu0 %v1441
    %1791 = vmatpush.msra.mxu0 %v1440
    %1792 = vmatmul.f32.gmra.mxu0 %v1259
    %v1793 = vpop.f32.mrf.mxu0
    %v1794 = vadd.f32 %v1774, %v1793
    %1795 = vdwg.mxu0
    %1796 = vmatpush.msra.mxu0 %v1471
    %1797 = vmatpush.msra.mxu0 %v1470
    %1798 = vmatpush.msra.mxu0 %v1469
    %1799 = vmatpush.msra.mxu0 %v1468
    %1800 = vmatpush.msra.mxu0 %v1467
    %1801 = vmatpush.msra.mxu0 %v1466
    %1802 = vmatpush.msra.mxu0 %v1465
    %1803 = vmatpush.msra.mxu0 %v1464
    %1804 = vmatpush.msra.mxu0 %v1463
    %1805 = vmatpush.msra.mxu0 %v1462
    %1806 = vmatpush.msra.mxu0 %v1461
    %1807 = vmatpush.msra.mxu0 %v1460
    %1808 = vmatpush.msra.mxu0 %v1459
    %1809 = vmatpush.msra.mxu0 %v1458
    %1810 = vmatpush.msra.mxu0 %v1457
    %1811 = vmatpush.msra.mxu0 %v1456
    %1812 = vmatmul.f32.gmra.mxu0 %v1260
    %v1813 = vpop.f32.mrf.mxu0
    %v1814 = vadd.f32 %v1794, %v1813
    %1815 = vdwg.mxu0
    %1816 = vmatpush.msra.mxu0 %v1487
    %1817 = vmatpush.msra.mxu0 %v1486
    %1818 = vmatpush.msra.mxu0 %v1485
    %1819 = vmatpush.msra.mxu0 %v1484
    %1820 = vmatpush.msra.mxu0 %v1483
    %1821 = vmatpush.msra.mxu0 %v1482
    %1822 = vmatpush.msra.mxu0 %v1481
    %1823 = vmatpush.msra.mxu0 %v1480
    %1824 = vmatpush.msra.mxu0 %v1479
    %1825 = vmatpush.msra.mxu0 %v1478
    %1826 = vmatpush.msra.mxu0 %v1477
    %1827 = vmatpush.msra.mxu0 %v1476
    %1828 = vmatpush.msra.mxu0 %v1475
    %1829 = vmatpush.msra.mxu0 %v1474
    %1830 = vmatpush.msra.mxu0 %v1473
    %1831 = vmatpush.msra.mxu0 %v1472
    %1832 = vmatmul.f32.gmra.mxu0 %v1261
    %v1833 = vpop.f32.mrf.mxu0
    %v1834 = vadd.f32 %v1814, %v1833
    %1835 = vdwg.mxu0
    %1836 = vmatpush.msra.mxu0 %v1503
    %1837 = vmatpush.msra.mxu0 %v1502
    %1838 = vmatpush.msra.mxu0 %v1501
    %1839 = vmatpush.msra.mxu0 %v1500
    %1840 = vmatpush.msra.mxu0 %v1499
    %1841 = vmatpush.msra.mxu0 %v1498
    %1842 = vmatpush.msra.mxu0 %v1497
    %1843 = vmatpush.msra.mxu0 %v1496
    %1844 = vmatpush.msra.mxu0 %v1495
    %1845 = vmatpush.msra.mxu0 %v1494
    %1846 = vmatpush.msra.mxu0 %v1493
    %1847 = vmatpush.msra.mxu0 %v1492
    %1848 = vmatpush.msra.mxu0 %v1491
    %1849 = vmatpush.msra.mxu0 %v1490
    %1850 = vmatpush.msra.mxu0 %v1489
    %1851 = vmatpush.msra.mxu0 %v1488
    %1852 = vmatmul.f32.gmra.mxu0 %v1262
    %v1853 = vpop.f32.mrf.mxu0
    %v1854 = vadd.f32 %v1834, %v1853
    %1855 = vdwg.mxu0
    %1856 = vmatpush.msra.mxu0 %v1519
    %1857 = vmatpush.msra.mxu0 %v1518
    %1858 = vmatpush.msra.mxu0 %v1517
    %1859 = vmatpush.msra.mxu0 %v1516
    %1860 = vmatpush.msra.mxu0 %v1515
    %1861 = vmatpush.msra.mxu0 %v1514
    %1862 = vmatpush.msra.mxu0 %v1513
    %1863 = vmatpush.msra.mxu0 %v1512
    %1864 = vmatpush.msra.mxu0 %v1511
    %1865 = vmatpush.msra.mxu0 %v1510
    %1866 = vmatpush.msra.mxu0 %v1509
    %1867 = vmatpush.msra.mxu0 %v1508
    %1868 = vmatpush.msra.mxu0 %v1507
    %1869 = vmatpush.msra.mxu0 %v1506
    %1870 = vmatpush.msra.mxu0 %v1505
    %1871 = vmatpush.msra.mxu0 %v1504
    %1872 = vmatmul.f32.gmra.mxu0 %v1263
    %v1873 = vpop.f32.mrf.mxu0
    %v1874 = vadd.f32 %v1854, %v1873
    %1875 = vdwg.mxu0
    %v1876 = vld [vmem:[#allocation10] sm:$0x1]
    %v1878 = vperm.slane %v1876, 0
    %v1880 = vadd.f32 %v1874, %v1878
    %1881 = vst [vmem:[#allocation11] sm:$0x3] %v1880
    // Predicated region
    $region42: #{tpu_custom_call.1} parent=1 // pred_check
      _
    $region43: #{tpu_custom_call.1} parent=1 // pred_check_branch
      %1883 = sbr.rel (0) target = $region45
    $region44: #{tpu_custom_call.1} parent=1 // pred_region
      %1885 = vsyncadd [#allocation4], 0
      %s1887 = sshll.u32 [#allocation11], 4
      %s1888 = int_to_ptr.vmem [resolvable:$true] %s1887
      %s1889 = sshll.u32 %s5, 4
      %s1890 = int_to_ptr.hbm [resolvable:$true] %s1889
      %1892 = dma.vmem_to_hbm [thread:$0]  %s1888, 32, %s1890, [#allocation4]
    $region45: #{tpu_custom_call.1} parent=1 // pred_fallthru
      _
    // Predicated region
    $region46: #{tpu_custom_call.1} parent=1 // pred_check
      _
    $region47: #{tpu_custom_call.1} parent=1 // pred_check_branch
      %1894 = sbr.rel (0) target = $region49
    $region48: #{tpu_custom_call.1} parent=1 // pred_region
      %1896 = dma.done [#allocation4], 32
    $region49: #{tpu_custom_call.1} parent=1 // pred_fallthru
      _
    %1897 = vsyncpa [#allocation3], 1
    %1898 = vsyncpa [#allocation6], 1
    %1899 = vsyncpa [#allocation9], 1
    %1900 = vsyncpa [#allocation4], 1

</llo_original>
